<compile_context>
chip_gen: v7x
topology: tpu7x:2x2x1
jax: 0.10.0
libtpu: 0.0.40
codegen_flags: <defaults>
</compile_context>

<pallas_src>
import math

import jax
import jax.numpy as jnp
from jax.experimental import pallas as pl
from jax.experimental.pallas import tpu as pltpu

_LANE = 128
_SUBLANE = 8
_MIB = 1 << 20


def _round_up(x, m):
    return (x + m - 1) // m * m


# ----------------------------------------------------------------------------
# Kernels
# ----------------------------------------------------------------------------
def _gru_pointwise(gx, gh, h, Hp):
    """Gate math in f32 on lane-aligned (gate width = Hp = k*128) slices."""
    x_r, x_i, x_n = gx[:, 0:Hp], gx[:, Hp:2 * Hp], gx[:, 2 * Hp:3 * Hp]
    h_r, h_i, h_n = gh[:, 0:Hp], gh[:, Hp:2 * Hp], gh[:, 2 * Hp:3 * Hp]
    resetgate = jax.nn.sigmoid(x_r + h_r)
    inputgate = jax.nn.sigmoid(x_i + h_i)
    newgate = jnp.tanh(x_n + resetgate * h_n)
    return newgate + inputgate * (h - newgate)


def _gru_cell_kernel(x_ref, h_ref, wx_ref, wh_ref, bx_ref, bh_ref, out_ref):
    """Single-timestep fused VNMT-GRU cell for one batch tile.

    x_ref : (Bb, Kxp)   bf16  fused [input_, cj(, he)] activations (K padded)
    h_ref : (Bb, Hp)    f32   previous hidden state (gate-lane padded)
    wx_ref: (Kxp, 3Hp)  bf16  fused [w_ih; w_ch(; w_zh)]^T
    wh_ref: (Hp, 3Hp)   bf16  w_hh^T (zero rows in K pad)
    bx_ref: (1, 3Hp)    f32   b_ih + b_ch (+ b_zh)
    bh_ref: (1, 3Hp)    f32   b_hh (kept separate: needed inside reset*h_n)
    out_ref:(Bb, Hp)          next hidden state (pad lanes are don't-care)
    """
    Hp = out_ref.shape[1]
    h = h_ref[...]
    gx = jnp.dot(x_ref[...], wx_ref[...],
                 preferred_element_type=jnp.float32) + bx_ref[...]
    gh = jnp.dot(h.astype(wh_ref.dtype), wh_ref[...],
                 preferred_element_type=jnp.float32) + bh_ref[...]
    out_ref[...] = _gru_pointwise(gx, gh, h, Hp).astype(out_ref.dtype)


def _gru_seq_kernel(x_ref, h0_ref, wx_ref, wh_ref, bx_ref, bh_ref,
                    out_ref, h_scr):
    """Sequence variant: grid axis = time ("arbitrary"), h carried in VMEM
    scratch, weights held VMEM-resident across all timesteps."""
    Hp = h_scr.shape[1]
    t = pl.program_id(0)

    @pl.when(t == 0)
    def _():
        h_scr[...] = h0_ref[...]

    h = h_scr[...]
    gx = jnp.dot(x_ref[0], wx_ref[...],
                 preferred_element_type=jnp.float32) + bx_ref[...]
    gh = jnp.dot(h.astype(wh_ref.dtype), wh_ref[...],
                 preferred_element_type=jnp.float32) + bh_ref[...]
    hy = _gru_pointwise(gx, gh, h, Hp)
    h_scr[...] = hy
    out_ref[0] = hy.astype(out_ref.dtype)


# ----------------------------------------------------------------------------
# One-time weight preparation
# ----------------------------------------------------------------------------
def prepare_params(params, use_he=True, compute_dtype=jnp.bfloat16):
    """Transpose, fuse, pad and cast the weights ONCE (not per call)."""
    H = params['w_hh'].shape[1]
    input_size = params['w_ih'].shape[1]
    Hp = _round_up(H, _LANE)

    def pad_gates_cols(w_t):                   # (K, 3H) -> (K, 3*Hp)
        K = w_t.shape[0]
        w3 = w_t.reshape(K, 3, H)
        w3 = jnp.pad(w3, ((0, 0), (0, 0), (0, Hp - H)))
        return w3.reshape(K, 3 * Hp)

    def pad_gates_bias(b):                     # (3H,) -> (1, 3*Hp)
        b3 = b.reshape(3, H)
        b3 = jnp.pad(b3, ((0, 0), (0, Hp - H)))
        return b3.reshape(1, 3 * Hp)

    wx_parts = [params['w_ih'].T, params['w_ch'].T]
    bx = params['b_ih'] + params['b_ch']
    if use_he:
        wx_parts.append(params['w_zh'].T)
        bx = bx + params['b_zh']
    wx = pad_gates_cols(jnp.concatenate(wx_parts, axis=0))   # (Kx, 3Hp)
    Kx = wx.shape[0]
    Kxp = _round_up(Kx, _LANE)
    wx = jnp.pad(wx, ((0, Kxp - Kx), (0, 0)))                # zero K-pad rows

    wh = pad_gates_cols(params['w_hh'].T)                    # (H, 3Hp)
    wh = jnp.pad(wh, ((0, Hp - H), (0, 0)))                  # zero K-pad rows

    return {
        'hidden_size': H,
        'hidden_pad': Hp,
        'input_size': input_size,
        'k_fused': Kx,
        'k_fused_pad': Kxp,
        'use_he': use_he,
        'compute_dtype': compute_dtype,
        'wx': wx.astype(compute_dtype),
        'wh': wh.astype(compute_dtype),
        'bx': pad_gates_bias(bx).astype(jnp.float32),
        'bh': pad_gates_bias(params['b_hh']).astype(jnp.float32),
    }


# ----------------------------------------------------------------------------
# pallas_call builders
# ----------------------------------------------------------------------------
def _vmem_budget_bytes(block_b, Kxp, Hp, weight_bufs):
    """Derived VMEM budget; clamped to [32, 48] MiB so it always fits v7x."""
    w = (Kxp * 3 * Hp + Hp * 3 * Hp) * 2 * weight_bufs       # bf16 weights
    b = 2 * 3 * Hp * 4 * weight_bufs                          # f32 biases
    act = 2 * (block_b * Kxp * 2 + 2 * block_b * Hp * 4)      # x + h + out bufs
    tmp = 2 * block_b * 3 * Hp * 4                            # gx, gh f32
    est = w + b + act + tmp
    return int(min(max(2 * est + 4 * _MIB, 32 * _MIB), 48 * _MIB))


def _build_cell_call(*, block_b, n_tiles, Kxp, Hp, out_dtype,
                     single_buffer_weights, flops, trans, bytes_acc):
    wkw = {'pipeline_mode': pl.Buffered(1)} if single_buffer_weights else {}
    weight_bufs = 1 if single_buffer_weights else 2
    return pl.pallas_call(
        _gru_cell_kernel,
        out_shape=jax.ShapeDtypeStruct((block_b * n_tiles, Hp), out_dtype),
        grid=(n_tiles,),
        in_specs=[
            pl.BlockSpec((block_b, Kxp), lambda i: (i, 0)),
            pl.BlockSpec((block_b, Hp), lambda i: (i, 0)),
            # Constant index_map: weights/biases stay VMEM-resident.
            pl.BlockSpec((Kxp, 3 * Hp), lambda i: (0, 0), **wkw),
            pl.BlockSpec((Hp, 3 * Hp), lambda i: (0, 0), **wkw),
            pl.BlockSpec((1, 3 * Hp), lambda i: (0, 0), **wkw),
            pl.BlockSpec((1, 3 * Hp), lambda i: (0, 0), **wkw),
        ],
        out_specs=pl.BlockSpec((block_b, Hp), lambda i: (i, 0)),
        compiler_params=pltpu.CompilerParams(
            dimension_semantics=("parallel",),
            vmem_limit_bytes=_vmem_budget_bytes(block_b, Kxp, Hp, weight_bufs)),
        cost_estimate=pl.CostEstimate(flops=flops, transcendentals=trans,
                                      bytes_accessed=bytes_acc),
    )


def _build_seq_call(*, T, Bp, Kxp, Hp, out_dtype, single_buffer_weights,
                    flops, trans, bytes_acc):
    wkw = {'pipeline_mode': pl.Buffered(1)} if single_buffer_weights else {}
    weight_bufs = 1 if single_buffer_weights else 2
    return pl.pallas_call(
        _gru_seq_kernel,
        out_shape=jax.ShapeDtypeStruct((T, Bp, Hp), out_dtype),
        grid=(T,),
        in_specs=[
            pl.BlockSpec((1, Bp, Kxp), lambda t: (t, 0, 0)),
            pl.BlockSpec((Bp, Hp), lambda t: (0, 0)),
            pl.BlockSpec((Kxp, 3 * Hp), lambda t: (0, 0), **wkw),
            pl.BlockSpec((Hp, 3 * Hp), lambda t: (0, 0), **wkw),
            pl.BlockSpec((1, 3 * Hp), lambda t: (0, 0), **wkw),
            pl.BlockSpec((1, 3 * Hp), lambda t: (0, 0), **wkw),
        ],
        out_specs=pl.BlockSpec((1, Bp, Hp), lambda t: (t, 0, 0)),
        scratch_shapes=[pltpu.VMEM((Bp, Hp), jnp.float32)],
        compiler_params=pltpu.CompilerParams(
            dimension_semantics=("arbitrary",),
            vmem_limit_bytes=_vmem_budget_bytes(Bp, Kxp, Hp, weight_bufs)),
        cost_estimate=pl.CostEstimate(flops=flops, transcendentals=trans,
                                      bytes_accessed=bytes_acc),
    )


# ----------------------------------------------------------------------------
# Public wrappers
# ----------------------------------------------------------------------------
def custom_gru_cell(prep, x, hx, cj, he=None):
    """Forward pass matching CustomGRUCell.forward(input_, hx, cj, he)."""
    if (he is not None) != prep['use_he']:
        raise ValueError("prepared params do not match the he argument")

    B = x.shape[0]
    H, Hp = prep['hidden_size'], prep['hidden_pad']
    Kx, Kxp = prep['k_fused'], prep['k_fused_pad']
    cd = prep['compute_dtype']

    parts = [x, cj] + ([he] if he is not None else [])
    xcz = jnp.concatenate([p.astype(cd) for p in parts], axis=1)     # (B, Kx)
    if xcz.shape[1] != Kx:
        raise ValueError("input widths do not match prepared params")

    Bp0 = _round_up(B, _SUBLANE)
    # Split the batch across TensorCores only when the per-tile arithmetic
    # intensity over the weights (~block_b flop/byte) beats the doubled
    # weight DMA; single-TC v5e/v6e always use a single grid point.
    n_tiles = 2 if Bp0 >= 1024 else 1
    block_b = _round_up(-(-Bp0 // n_tiles), _SUBLANE)   # pad <= 7 rows/tile
    Bp = block_b * n_tiles

    xcz = jnp.pad(xcz, ((0, Bp - B), (0, Kxp - Kx)))
    h_p = jnp.pad(hx.astype(jnp.float32), ((0, Bp - B), (0, Hp - H)))

    flops = 2 * Bp * (Kxp + Hp) * 3 * Hp + 10 * Bp * Hp
    trans = 3 * Bp * Hp
    bytes_acc = ((prep['wx'].size + prep['wh'].size) * 2
                 + (prep['bx'].size + prep['bh'].size) * 4
                 + xcz.size * 2 + h_p.size * 4 + Bp * Hp * 4)

    out = None
    for single_buf in (True, False):
        try:
            call = _build_cell_call(block_b=block_b, n_tiles=n_tiles, Kxp=Kxp,
                                    Hp=Hp, out_dtype=hx.dtype,
                                    single_buffer_weights=single_buf,
                                    flops=flops, trans=trans,
                                    bytes_acc=bytes_acc)
            out = call(xcz, h_p, prep['wx'], prep['wh'],
                       prep['bx'], prep['bh'])
            break
        except Exception:
            if not single_buf:
                raise
    return out[:B, :H]


def custom_gru_cell_sequence(prep, x_seq, h0, cj_seq, he_seq=None):
    """Step the cell over a (T, B, ...) sequence with the weights DMA'd from
    HBM once for the whole sequence (time axis = 'arbitrary' grid, h carried
    in VMEM scratch). Returns (T, B, H) hidden states."""
    if (he_seq is not None) != prep['use_he']:
        raise ValueError("prepared params do not match the he argument")

    T, B = x_seq.shape[0], x_seq.shape[1]
    H, Hp = prep['hidden_size'], prep['hidden_pad']
    Kx, Kxp = prep['k_fused'], prep['k_fused_pad']
    cd = prep['compute_dtype']

    parts = [x_seq, cj_seq] + ([he_seq] if he_seq is not None else [])
    xcz = jnp.concatenate([p.astype(cd) for p in parts], axis=2)  # (T, B, Kx)
    Bp = _round_up(B, _SUBLANE)
    xcz = jnp.pad(xcz, ((0, 0), (0, Bp - B), (0, Kxp - Kx)))
    h_p = jnp.pad(h0.astype(jnp.float32), ((0, Bp - B), (0, Hp - H)))

    flops = T * (2 * Bp * (Kxp + Hp) * 3 * Hp + 10 * Bp * Hp)
    trans = T * 3 * Bp * Hp
    bytes_acc = ((prep['wx'].size + prep['wh'].size) * 2
                 + (prep['bx'].size + prep['bh'].size) * 4
                 + xcz.size * 2 + h_p.size * 4 + T * Bp * Hp * 4)

    out = None
    for single_buf in (True, False):
        try:
            call = _build_seq_call(T=T, Bp=Bp, Kxp=Kxp, Hp=Hp,
                                   out_dtype=h0.dtype,
                                   single_buffer_weights=single_buf,
                                   flops=flops, trans=trans,
                                   bytes_acc=bytes_acc)
            out = call(xcz, h_p, prep['wx'], prep['wh'],
                       prep['bx'], prep['bh'])
            break
        except Exception:
            if not single_buf:
                raise
    return out[:, :B, :H]


# ----------------------------------------------------------------------------
# Init + references (for correctness checks)
# ----------------------------------------------------------------------------
def init_params(key, input_size, hidden_size, dtype=jnp.float32):
    """Uniform(-stdv, stdv) init, matching reset_parameters()."""
    stdv = 1.0 / math.sqrt(hidden_size)
    keys = jax.random.split(key, 8)
    shapes = {
        'w_ih': (3 * hidden_size, input_size),
        'w_hh': (3 * hidden_size, hidden_size),
        'w_ch': (3 * hidden_size, hidden_size),
        'w_zh': (3 * hidden_size, hidden_size),
        'b_ih': (3 * hidden_size,),
        'b_hh': (3 * hidden_size,),
        'b_ch': (3 * hidden_size,),
        'b_zh': (3 * hidden_size,),
    }
    return {
        name: jax.random.uniform(k, shape, dtype, minval=-stdv, maxval=stdv)
        for (name, shape), k in zip(shapes.items(), keys)
    }


def _gates_to_hy(gi, gh, gc, gz, hx):
    i_r, i_i, i_n = jnp.split(gi, 3, axis=1)
    h_r, h_i, h_n = jnp.split(gh, 3, axis=1)
    c_r, c_i, c_n = jnp.split(gc, 3, axis=1)
    if gz is not None:
        z_r, z_i, z_n = jnp.split(gz, 3, axis=1)
        resetgate = jax.nn.sigmoid(i_r + h_r + c_r + z_r)
        inputgate = jax.nn.sigmoid(i_i + h_i + c_i + z_i)
        newgate = jnp.tanh(i_n + resetgate * h_n + c_n + z_n)
    else:
        resetgate = jax.nn.sigmoid(i_r + h_r + c_r)
        inputgate = jax.nn.sigmoid(i_i + h_i + c_i)
        newgate = jnp.tanh(i_n + resetgate * h_n + c_n)
    return newgate + inputgate * (hx - newgate)


def _reference_f32(params, x, hx, cj, he):
    gi = x @ params['w_ih'].T + params['b_ih']
    gh = hx @ params['w_hh'].T + params['b_hh']
    gc = cj @ params['w_ch'].T + params['b_ch']
    gz = (he @ params['w_zh'].T + params['b_zh']) if he is not None else None
    return _gates_to_hy(gi, gh, gc, gz, hx)


def _reference_matched(params, x, hx, cj, he, compute_dtype=jnp.bfloat16):
    cd = compute_dtype

    def lin(a, w, b):
        return jnp.dot(a.astype(cd), w.T.astype(cd),
                       preferred_element_type=jnp.float32) + b

    gi = lin(x, params['w_ih'], params['b_ih'])
    gh = lin(hx, params['w_hh'], params['b_hh'])
    gc = lin(cj, params['w_ch'], params['b_ch'])
    gz = lin(he, params['w_zh'], params['b_zh']) if he is not None else None
    return _gates_to_hy(gi, gh, gc, gz, hx)


if __name__ == "__main__":
    batch = 8
    input_size = 64
    hidden_size = 32
    seq_len = 4

    key = jax.random.PRNGKey(0)
    kp, kx, kh, kc, ke, ks = jax.random.split(key, 6)

    params = init_params(kp, input_size, hidden_size)
    x = jax.random.normal(kx, (batch, input_size), jnp.float32)
    hx = jax.random.normal(kh, (batch, hidden_size), jnp.float32)
    cj = jax.random.normal(kc, (batch, hidden_size), jnp.float32)
    he = jax.random.normal(ke, (batch, hidden_size), jnp.float32)

    # Full VNMT path (he provided). Weight prep happens once, reused per step.
    prep = prepare_params(params, use_he=True)
    hy = custom_gru_cell(prep, x, hx, cj, he)
    jax.block_until_ready(hy)
    assert hy.shape == (batch, hidden_size)
    assert jnp.allclose(hy, _reference_matched(params, x, hx, cj, he),
                        atol=1e-3, rtol=1e-3), "mismatch vs matched-precision ref"
    assert jnp.allclose(hy, _reference_f32(params, x, hx, cj, he),
                        atol=5e-2, rtol=0), "mismatch vs f32 ref"

    # he=None path: w_zh / b_zh / he operands are never built or DMA'd
    # (Kx = input_size + H = 96 here -> exercises the Kx->128 padding).
    prep_nohe = prepare_params(params, use_he=False)
    hy0 = custom_gru_cell(prep_nohe, x, hx, cj, None)
    jax.block_until_ready(hy0)
    assert hy0.shape == (batch, hidden_size)
    assert jnp.allclose(hy0, _reference_matched(params, x, hx, cj, None),
                        atol=1e-3, rtol=1e-3), "mismatch vs matched ref (no he)"
    assert jnp.allclose(hy0, _reference_f32(params, x, hx, cj, None),
                        atol=5e-2, rtol=0), "mismatch vs f32 ref (no he)"

    # Sequence entry point: weights DMA'd once for the whole sequence.
    x_seq = jax.random.normal(ks, (seq_len, batch, input_size), jnp.float32)
    cj_seq = jnp.stack([cj] * seq_len)
    he_seq = jnp.stack([he] * seq_len)
    hseq = custom_gru_cell_sequence(prep, x_seq, hx, cj_seq, he_seq)
    jax.block_until_ready(hseq)
    assert hseq.shape == (seq_len, batch, hidden_size)

    h_ref = hx
    for t in range(seq_len):
        h_ref = _reference_matched(params, x_seq[t], h_ref, cj_seq[t], he_seq[t])
        assert jnp.allclose(hseq[t], h_ref, atol=2e-3, rtol=2e-3), \
            f"sequence mismatch at t={t}"

    print("KERNEL_OK")
</pallas_src>

<mosaic_0001>
module attributes {stable_mosaic.version = 11 : i64} {
  func.func @_gru_cell_kernel(%arg0: i32, %arg1: memref<8x128xbf16, #tpu.memory_space<vmem>>, %arg2: memref<8x128xf32, #tpu.memory_space<vmem>>, %arg3: memref<128x384xbf16, #tpu.memory_space<vmem>>, %arg4: memref<128x384xbf16, #tpu.memory_space<vmem>>, %arg5: memref<1x384xf32, #tpu.memory_space<vmem>>, %arg6: memref<1x384xf32, #tpu.memory_space<vmem>>, %arg7: memref<8x128xf32, #tpu.memory_space<vmem>>) attributes {dimension_semantics = [#tpu.dimension_semantics<parallel>], iteration_bounds = array<i64: 1>, scalar_prefetch = 0 : i64, scratch_operands = 0 : i64, tpu.core_type = #tpu.core_type<tc>, window_params = [{transform_indices = @transform_0, window_bounds = array<i64: 8, 128>}, {transform_indices = @transform_1, window_bounds = array<i64: 8, 128>}, {pipeline_mode = #tpu.pipeline_mode<synchronous>, transform_indices = @transform_2, window_bounds = array<i64: 128, 384>}, {pipeline_mode = #tpu.pipeline_mode<synchronous>, transform_indices = @transform_3, window_bounds = array<i64: 128, 384>}, {pipeline_mode = #tpu.pipeline_mode<synchronous>, transform_indices = @transform_4, window_bounds = array<i64: 1, 384>}, {pipeline_mode = #tpu.pipeline_mode<synchronous>, transform_indices = @transform_5, window_bounds = array<i64: 1, 384>}, {transform_indices = @transform_6, window_bounds = array<i64: 8, 128>}]} {
    %c0 = arith.constant 0 : index
    %c0_0 = arith.constant 0 : index
    %0 = vector.load %arg2[%c0, %c0_0] : memref<8x128xf32, #tpu.memory_space<vmem>>, vector<8x128xf32>
    %c0_1 = arith.constant 0 : index
    %c0_2 = arith.constant 0 : index
    %1 = vector.load %arg1[%c0_1, %c0_2] : memref<8x128xbf16, #tpu.memory_space<vmem>>, vector<8x128xbf16>
    %c0_3 = arith.constant 0 : index
    %c0_4 = arith.constant 0 : index
    %2 = vector.load %arg3[%c0_3, %c0_4] : memref<128x384xbf16, #tpu.memory_space<vmem>>, vector<128x384xbf16>
    %cst = arith.constant dense<0.000000e+00> : vector<8x384xf32>
    %3 = tpu.matmul %1, %2, %cst {dimension_numbers = #tpu.dot_dimension_numbers<[1], [0], [0], [1], [0, 0, 1, 1], [], []>} : vector<8x128xbf16>, vector<128x384xbf16>, vector<8x384xf32> -> vector<8x384xf32>
    %c0_5 = arith.constant 0 : index
    %c0_6 = arith.constant 0 : index
    %4 = vector.load %arg5[%c0_5, %c0_6] : memref<1x384xf32, #tpu.memory_space<vmem>>, vector<1x384xf32>
    %5 = vector.broadcast %4 : vector<1x384xf32> to vector<8x384xf32>
    %6 = arith.addf %3, %5 : vector<8x384xf32>
    %7 = arith.truncf %0 : vector<8x128xf32> to vector<8x128xbf16>
    %c0_7 = arith.constant 0 : index
    %c0_8 = arith.constant 0 : index
    %8 = vector.load %arg4[%c0_7, %c0_8] : memref<128x384xbf16, #tpu.memory_space<vmem>>, vector<128x384xbf16>
    %cst_9 = arith.constant dense<0.000000e+00> : vector<8x384xf32>
    %9 = tpu.matmul %7, %8, %cst_9 {dimension_numbers = #tpu.dot_dimension_numbers<[1], [0], [0], [1], [0, 0, 1, 1], [], []>} : vector<8x128xbf16>, vector<128x384xbf16>, vector<8x384xf32> -> vector<8x384xf32>
    %c0_10 = arith.constant 0 : index
    %c0_11 = arith.constant 0 : index
    %10 = vector.load %arg6[%c0_10, %c0_11] : memref<1x384xf32, #tpu.memory_space<vmem>>, vector<1x384xf32>
    %11 = vector.broadcast %10 : vector<1x384xf32> to vector<8x384xf32>
    %12 = arith.addf %9, %11 : vector<8x384xf32>
    %13 = vector.extract_strided_slice %6 {offsets = [0, 0], sizes = [8, 128], strides = [1, 1]} : vector<8x384xf32> to vector<8x128xf32>
    %14 = vector.extract_strided_slice %6 {offsets = [0, 128], sizes = [8, 128], strides = [1, 1]} : vector<8x384xf32> to vector<8x128xf32>
    %15 = vector.extract_strided_slice %6 {offsets = [0, 256], sizes = [8, 128], strides = [1, 1]} : vector<8x384xf32> to vector<8x128xf32>
    %16 = vector.extract_strided_slice %12 {offsets = [0, 0], sizes = [8, 128], strides = [1, 1]} : vector<8x384xf32> to vector<8x128xf32>
    %17 = vector.extract_strided_slice %12 {offsets = [0, 128], sizes = [8, 128], strides = [1, 1]} : vector<8x384xf32> to vector<8x128xf32>
    %18 = vector.extract_strided_slice %12 {offsets = [0, 256], sizes = [8, 128], strides = [1, 1]} : vector<8x384xf32> to vector<8x128xf32>
    %19 = arith.addf %13, %16 : vector<8x128xf32>
    %20 = arith.negf %19 : vector<8x128xf32>
    %21 = math.exp %20 : vector<8x128xf32>
    %cst_12 = arith.constant 1.000000e+00 : f32
    %22 = vector.broadcast %cst_12 : f32 to vector<8x128xf32>
    %23 = arith.addf %22, %21 : vector<8x128xf32>
    %24 = arith.divf %22, %23 : vector<8x128xf32>
    %25 = arith.addf %14, %17 : vector<8x128xf32>
    %26 = arith.negf %25 : vector<8x128xf32>
    %27 = math.exp %26 : vector<8x128xf32>
    %cst_13 = arith.constant 1.000000e+00 : f32
    %28 = vector.broadcast %cst_13 : f32 to vector<8x128xf32>
    %29 = arith.addf %28, %27 : vector<8x128xf32>
    %30 = arith.divf %28, %29 : vector<8x128xf32>
    %31 = arith.mulf %24, %18 : vector<8x128xf32>
    %32 = arith.addf %15, %31 : vector<8x128xf32>
    %33 = math.tanh %32 : vector<8x128xf32>
    %34 = arith.subf %0, %33 : vector<8x128xf32>
    %35 = arith.mulf %30, %34 : vector<8x128xf32>
    %36 = arith.addf %33, %35 : vector<8x128xf32>
    %c0_14 = arith.constant 0 : index
    %c0_15 = arith.constant 0 : index
    %37 = vector.load %arg7[%c0_14, %c0_15] : memref<8x128xf32, #tpu.memory_space<vmem>>, vector<8x128xf32>
    tpu.vector_store %arg7[%c0_14, %c0_15], %36 {strides = array<i32>} : memref<8x128xf32, #tpu.memory_space<vmem>>, vector<8x128xf32>,
    return
  }
  func.func @transform_0(%arg0: i32) -> (i32, i32) {
    %c0_i32 = arith.constant 0 : i32
    %c0_i32_0 = arith.constant 0 : i32
    return %arg0, %c0_i32 : i32, i32
  }
  func.func @transform_1(%arg0: i32) -> (i32, i32) {
    %c0_i32 = arith.constant 0 : i32
    %c0_i32_0 = arith.constant 0 : i32
    return %arg0, %c0_i32 : i32, i32
  }
  func.func @transform_2(%arg0: i32) -> (i32, i32) {
    %c0_i32 = arith.constant 0 : i32
    %c0_i32_0 = arith.constant 0 : i32
    %c0_i32_1 = arith.constant 0 : i32
    return %c0_i32, %c0_i32_0 : i32, i32
  }
  func.func @transform_3(%arg0: i32) -> (i32, i32) {
    %c0_i32 = arith.constant 0 : i32
    %c0_i32_0 = arith.constant 0 : i32
    %c0_i32_1 = arith.constant 0 : i32
    return %c0_i32, %c0_i32_0 : i32, i32
  }
  func.func @transform_4(%arg0: i32) -> (i32, i32) {
    %c0_i32 = arith.constant 0 : i32
    %c0_i32_0 = arith.constant 0 : i32
    %c0_i32_1 = arith.constant 0 : i32
    return %c0_i32, %c0_i32_0 : i32, i32
  }
  func.func @transform_5(%arg0: i32) -> (i32, i32) {
    %c0_i32 = arith.constant 0 : i32
    %c0_i32_0 = arith.constant 0 : i32
    %c0_i32_1 = arith.constant 0 : i32
    return %c0_i32, %c0_i32_0 : i32, i32
  }
  func.func @transform_6(%arg0: i32) -> (i32, i32) {
    %c0_i32 = arith.constant 0 : i32
    %c0_i32_0 = arith.constant 0 : i32
    return %arg0, %c0_i32 : i32, i32
  }
}

module attributes {stable_mosaic.version = 11 : i64} {
  func.func @_gru_cell_kernel(%arg0: i32, %arg1: memref<8x128xbf16, #tpu.memory_space<vmem>>, %arg2: memref<8x128xf32, #tpu.memory_space<vmem>>, %arg3: memref<128x384xbf16, #tpu.memory_space<vmem>>, %arg4: memref<128x384xbf16, #tpu.memory_space<vmem>>, %arg5: memref<1x384xf32, #tpu.memory_space<vmem>>, %arg6: memref<1x384xf32, #tpu.memory_space<vmem>>, %arg7: memref<8x128xf32, #tpu.memory_space<vmem>>) attributes {dimension_semantics = [#tpu.dimension_semantics<parallel>], iteration_bounds = array<i64: 1>, scalar_prefetch = 0 : i64, scratch_operands = 0 : i64, tpu.core_type = #tpu.core_type<tc>, window_params = [{transform_indices = @transform_0, window_bounds = array<i64: 8, 128>}, {transform_indices = @transform_1, window_bounds = array<i64: 8, 128>}, {pipeline_mode = #tpu.pipeline_mode<synchronous>, transform_indices = @transform_2, window_bounds = array<i64: 128, 384>}, {pipeline_mode = #tpu.pipeline_mode<synchronous>, transform_indices = @transform_3, window_bounds = array<i64: 128, 384>}, {pipeline_mode = #tpu.pipeline_mode<synchronous>, transform_indices = @transform_4, window_bounds = array<i64: 1, 384>}, {pipeline_mode = #tpu.pipeline_mode<synchronous>, transform_indices = @transform_5, window_bounds = array<i64: 1, 384>}, {transform_indices = @transform_6, window_bounds = array<i64: 8, 128>}]} {
    %c0 = arith.constant 0 : index
    %c0_0 = arith.constant 0 : index
    %0 = vector.load %arg2[%c0, %c0_0] : memref<8x128xf32, #tpu.memory_space<vmem>>, vector<8x128xf32>
    %c0_1 = arith.constant 0 : index
    %c0_2 = arith.constant 0 : index
    %1 = vector.load %arg1[%c0_1, %c0_2] : memref<8x128xbf16, #tpu.memory_space<vmem>>, vector<8x128xbf16>
    %c0_3 = arith.constant 0 : index
    %c0_4 = arith.constant 0 : index
    %2 = vector.load %arg3[%c0_3, %c0_4] : memref<128x384xbf16, #tpu.memory_space<vmem>>, vector<128x384xbf16>
    %cst = arith.constant dense<0.000000e+00> : vector<8x384xf32>
    %3 = tpu.matmul %1, %2, %cst {dimension_numbers = #tpu.dot_dimension_numbers<[1], [0], [0], [1], [0, 0, 1, 1], [], []>} : vector<8x128xbf16>, vector<128x384xbf16>, vector<8x384xf32> -> vector<8x384xf32>
    %c0_5 = arith.constant 0 : index
    %c0_6 = arith.constant 0 : index
    %4 = vector.load %arg5[%c0_5, %c0_6] : memref<1x384xf32, #tpu.memory_space<vmem>>, vector<1x384xf32>
    %5 = vector.broadcast %4 : vector<1x384xf32> to vector<8x384xf32>
    %6 = arith.addf %3, %5 : vector<8x384xf32>
    %7 = arith.truncf %0 : vector<8x128xf32> to vector<8x128xbf16>
    %c0_7 = arith.constant 0 : index
    %c0_8 = arith.constant 0 : index
    %8 = vector.load %arg4[%c0_7, %c0_8] : memref<128x384xbf16, #tpu.memory_space<vmem>>, vector<128x384xbf16>
    %cst_9 = arith.constant dense<0.000000e+00> : vector<8x384xf32>
    %9 = tpu.matmul %7, %8, %cst_9 {dimension_numbers = #tpu.dot_dimension_numbers<[1], [0], [0], [1], [0, 0, 1, 1], [], []>} : vector<8x128xbf16>, vector<128x384xbf16>, vector<8x384xf32> -> vector<8x384xf32>
    %c0_10 = arith.constant 0 : index
    %c0_11 = arith.constant 0 : index
    %10 = vector.load %arg6[%c0_10, %c0_11] : memref<1x384xf32, #tpu.memory_space<vmem>>, vector<1x384xf32>
    %11 = vector.broadcast %10 : vector<1x384xf32> to vector<8x384xf32>
    %12 = arith.addf %9, %11 : vector<8x384xf32>
    %13 = vector.extract_strided_slice %6 {offsets = [0, 0], sizes = [8, 128], strides = [1, 1]} : vector<8x384xf32> to vector<8x128xf32>
    %14 = vector.extract_strided_slice %6 {offsets = [0, 128], sizes = [8, 128], strides = [1, 1]} : vector<8x384xf32> to vector<8x128xf32>
    %15 = vector.extract_strided_slice %6 {offsets = [0, 256], sizes = [8, 128], strides = [1, 1]} : vector<8x384xf32> to vector<8x128xf32>
    %16 = vector.extract_strided_slice %12 {offsets = [0, 0], sizes = [8, 128], strides = [1, 1]} : vector<8x384xf32> to vector<8x128xf32>
    %17 = vector.extract_strided_slice %12 {offsets = [0, 128], sizes = [8, 128], strides = [1, 1]} : vector<8x384xf32> to vector<8x128xf32>
    %18 = vector.extract_strided_slice %12 {offsets = [0, 256], sizes = [8, 128], strides = [1, 1]} : vector<8x384xf32> to vector<8x128xf32>
    %19 = arith.addf %13, %16 : vector<8x128xf32>
    %20 = arith.negf %19 : vector<8x128xf32>
    %21 = math.exp %20 : vector<8x128xf32>
    %cst_12 = arith.constant 1.000000e+00 : f32
    %22 = vector.broadcast %cst_12 : f32 to vector<8x128xf32>
    %23 = arith.addf %22, %21 : vector<8x128xf32>
    %24 = arith.divf %22, %23 : vector<8x128xf32>
    %25 = arith.addf %14, %17 : vector<8x128xf32>
    %26 = arith.negf %25 : vector<8x128xf32>
    %27 = math.exp %26 : vector<8x128xf32>
    %cst_13 = arith.constant 1.000000e+00 : f32
    %28 = vector.broadcast %cst_13 : f32 to vector<8x128xf32>
    %29 = arith.addf %28, %27 : vector<8x128xf32>
    %30 = arith.divf %28, %29 : vector<8x128xf32>
    %31 = arith.mulf %24, %18 : vector<8x128xf32>
    %32 = arith.addf %15, %31 : vector<8x128xf32>
    %33 = math.tanh %32 : vector<8x128xf32>
    %34 = arith.subf %0, %33 : vector<8x128xf32>
    %35 = arith.mulf %30, %34 : vector<8x128xf32>
    %36 = arith.addf %33, %35 : vector<8x128xf32>
    %c0_14 = arith.constant 0 : index
    %c0_15 = arith.constant 0 : index
    %37 = vector.load %arg7[%c0_14, %c0_15] : memref<8x128xf32, #tpu.memory_space<vmem>>, vector<8x128xf32>
    tpu.vector_store %arg7[%c0_14, %c0_15], %36 {strides = array<i32>} : memref<8x128xf32, #tpu.memory_space<vmem>>, vector<8x128xf32>,
    return
  }
  func.func @transform_0(%arg0: i32) -> (i32, i32) {
    %c0_i32 = arith.constant 0 : i32
    %c0_i32_0 = arith.constant 0 : i32
    return %arg0, %c0_i32 : i32, i32
  }
  func.func @transform_1(%arg0: i32) -> (i32, i32) {
    %c0_i32 = arith.constant 0 : i32
    %c0_i32_0 = arith.constant 0 : i32
    return %arg0, %c0_i32 : i32, i32
  }
  func.func @transform_2(%arg0: i32) -> (i32, i32) {
    %c0_i32 = arith.constant 0 : i32
    %c0_i32_0 = arith.constant 0 : i32
    %c0_i32_1 = arith.constant 0 : i32
    return %c0_i32, %c0_i32_0 : i32, i32
  }
  func.func @transform_3(%arg0: i32) -> (i32, i32) {
    %c0_i32 = arith.constant 0 : i32
    %c0_i32_0 = arith.constant 0 : i32
    %c0_i32_1 = arith.constant 0 : i32
    return %c0_i32, %c0_i32_0 : i32, i32
  }
  func.func @transform_4(%arg0: i32) -> (i32, i32) {
    %c0_i32 = arith.constant 0 : i32
    %c0_i32_0 = arith.constant 0 : i32
    %c0_i32_1 = arith.constant 0 : i32
    return %c0_i32, %c0_i32_0 : i32, i32
  }
  func.func @transform_5(%arg0: i32) -> (i32, i32) {
    %c0_i32 = arith.constant 0 : i32
    %c0_i32_0 = arith.constant 0 : i32
    %c0_i32_1 = arith.constant 0 : i32
    return %c0_i32, %c0_i32_0 : i32, i32
  }
  func.func @transform_6(%arg0: i32) -> (i32, i32) {
    %c0_i32 = arith.constant 0 : i32
    %c0_i32_0 = arith.constant 0 : i32
    return %arg0, %c0_i32 : i32, i32
  }
}

</mosaic_0001>

<llo_original>
// kernel: tpu_custom_call.1
$region0: #{tpu_custom_call.1}
  #allocation0 [shape = 'u32[]', space=smem, size = 0x4, offset = 0x4, fixed_abs, tag = 'smem constant byte address 0x4 - core index']
  #allocation1 [shape = 'u32[144,128]{1,0:T(1,128)}', space=vmem, size = 0x12000, scoped, tag = 'internal scratch']
  %s0 = inlined_call_operand.hbm [shape: bf16[8,128], index: 0, kind: input, shape index: {}]
  %s1 = inlined_call_operand.hbm [shape: f32[8,128], index: 1, kind: input, shape index: {}]
  %s2 = inlined_call_operand.hbm [shape: bf16[128,384], index: 2, kind: input, shape index: {}]
  %s3 = inlined_call_operand.hbm [shape: bf16[128,384], index: 3, kind: input, shape index: {}]
  %s4 = inlined_call_operand.vmem [shape: f32[1,384], index: 4, kind: input, shape index: {}]
  %s5 = inlined_call_operand.vmem [shape: f32[1,384], index: 5, kind: input, shape index: {}]
  %s6 = inlined_call_operand.hbm [shape: f32[8,128], index: 6, kind: output, shape index: {}]
  %s7 = sld [smem:[#allocation0]]
  $region50: #{tpu_custom_call.1} parent=0
    _
  %s9 = ssub.s32 1, %s7
  %s10 = scalar_select 0, %s9, %s7
  $region1: #{tpu_custom_call.1} parent=0
    #allocation2 [shape = 'u8[2048]{0}', space=vmem, size = 0x800, scoped, tag = 'input window, operand 0, single buffered']
    #allocation3 [shape = 's32[1]{0}', space=sflag, size = 0x4, scoped, tag = 'scoped memory for tpu_custom_call.1']
    #allocation4 [shape = 's32[1]{0}', space=sflag, size = 0x4, scoped, tag = 'scoped memory for tpu_custom_call.1']
    #allocation5 [shape = 'u8[4096]{0}', space=vmem, size = 0x1000, scoped, tag = 'input window, operand 1, single buffered']
    #allocation6 [shape = 's32[1]{0}', space=sflag, size = 0x4, scoped, tag = 'scoped memory for tpu_custom_call.1']
    #allocation7 [shape = 'u8[98304]{0}', space=vmem, size = 0x18000, scoped, tag = 'input window, operand 2, single buffered']
    #allocation8 [shape = 'u8[98304]{0}', space=vmem, size = 0x18000, scoped, tag = 'input window, operand 3, single buffered']
    #allocation9 [shape = 's32[1]{0}', space=sflag, size = 0x4, scoped, tag = 'scoped memory for tpu_custom_call.1']
    #allocation10 [shape = 'u8[4096]{0}', space=vmem, size = 0x1000, scoped, tag = 'output window, operand 0, single buffered']
    %11 = vsyncpa [#allocation3], 0
    %12 = vsyncpa [#allocation6], 0
    %13 = vsyncpa [#allocation9], 0
    %14 = vsyncpa [#allocation4], 0
    // Predicated region
    $region2: #{tpu_custom_call.1} parent=1 // pred_check
      _
    $region3: #{tpu_custom_call.1} parent=1 // pred_check_branch
      %16 = sbr.rel (0) target = $region5
    $region4: #{tpu_custom_call.1} parent=1 // pred_region
      %s18 = ssub.s32 64, 64
      %19 = vsyncadd [#allocation3], %s18
      %s21 = sshll.u32 [#allocation2], 4
      %s22 = int_to_ptr.vmem [resolvable:$true] %s21
      %24 = dma.hbm_to_vmem [thread:$0]  %s0, 64, %s22, [#allocation3]
    $region5: #{tpu_custom_call.1} parent=1 // pred_fallthru
      _
    // Predicated region
    $region6: #{tpu_custom_call.1} parent=1 // pred_check
      _
    $region7: #{tpu_custom_call.1} parent=1 // pred_check_branch
      %26 = sbr.rel (0) target = $region9
    $region8: #{tpu_custom_call.1} parent=1 // pred_region
      %s28 = ssub.s32 128, 128
      %29 = vsyncadd [#allocation6], %s28
      %s31 = sshll.u32 [#allocation5], 4
      %s32 = int_to_ptr.vmem [resolvable:$true] %s31
      %34 = dma.hbm_to_vmem [thread:$0]  %s1, 128, %s32, [#allocation6]
    $region9: #{tpu_custom_call.1} parent=1 // pred_fallthru
      _
    // Predicated region
    $region10: #{tpu_custom_call.1} parent=1 // pred_check
      _
    $region11: #{tpu_custom_call.1} parent=1 // pred_check_branch
      %36 = sbr.rel (0) target = $region13
    $region12: #{tpu_custom_call.1} parent=1 // pred_region
      %s38 = ssub.s32 3072, 3072
      %39 = vsyncadd [#allocation6], %s38
      %s40 = sshll.u32 [#allocation7], 4
      %s41 = int_to_ptr.vmem [resolvable:$true] %s40
      %46 = dma.hbm_to_vmem [thread:$0]  %s2, 3072, %s41, [#allocation6], 192, 192, 12
    $region13: #{tpu_custom_call.1} parent=1 // pred_fallthru
      _
    // Predicated region
    $region14: #{tpu_custom_call.1} parent=1 // pred_check
      _
    $region15: #{tpu_custom_call.1} parent=1 // pred_check_branch
      %48 = sbr.rel (0) target = $region17
    $region16: #{tpu_custom_call.1} parent=1 // pred_region
      %s50 = ssub.s32 3072, 3072
      %51 = vsyncadd [#allocation9], %s50
      %s52 = sshll.u32 [#allocation8], 4
      %s53 = int_to_ptr.vmem [resolvable:$true] %s52
      %58 = dma.hbm_to_vmem [thread:$0]  %s3, 3072, %s53, [#allocation9], 192, 192, 12
    $region17: #{tpu_custom_call.1} parent=1 // pred_fallthru
      _
    // Predicated region
    $region18: #{tpu_custom_call.1} parent=1 // pred_check
      _
    $region19: #{tpu_custom_call.1} parent=1 // pred_check_branch
      %60 = sbr.rel (0) target = $region21
    $region20: #{tpu_custom_call.1} parent=1 // pred_region
      _
    $region21: #{tpu_custom_call.1} parent=1 // pred_fallthru
      _
    // Predicated region
    $region22: #{tpu_custom_call.1} parent=1 // pred_check
      _
    $region23: #{tpu_custom_call.1} parent=1 // pred_check_branch
      %62 = sbr.rel (0) target = $region25
    $region24: #{tpu_custom_call.1} parent=1 // pred_region
      _
    $region25: #{tpu_custom_call.1} parent=1 // pred_fallthru
      _
    // Predicated region
    $region26: #{tpu_custom_call.1} parent=1 // pred_check
      _
    $region27: #{tpu_custom_call.1} parent=1 // pred_check_branch
      %64 = sbr.rel (0) target = $region29
    $region28: #{tpu_custom_call.1} parent=1 // pred_region
      %65 = dma.done [#allocation3], 64
    $region29: #{tpu_custom_call.1} parent=1 // pred_fallthru
      _
    // Predicated region
    $region30: #{tpu_custom_call.1} parent=1 // pred_check
      _
    $region31: #{tpu_custom_call.1} parent=1 // pred_check_branch
      %67 = sbr.rel (0) target = $region33
    $region32: #{tpu_custom_call.1} parent=1 // pred_region
      %68 = dma.done [#allocation6], 128
    $region33: #{tpu_custom_call.1} parent=1 // pred_fallthru
      _
    // Predicated region
    $region34: #{tpu_custom_call.1} parent=1 // pred_check
      _
    $region35: #{tpu_custom_call.1} parent=1 // pred_check_branch
      %70 = sbr.rel (0) target = $region37
    $region36: #{tpu_custom_call.1} parent=1 // pred_region
      %71 = dma.done [#allocation6], 3072
    $region37: #{tpu_custom_call.1} parent=1 // pred_fallthru
      _
    // Predicated region
    $region38: #{tpu_custom_call.1} parent=1 // pred_check
      _
    $region39: #{tpu_custom_call.1} parent=1 // pred_check_branch
      %73 = sbr.rel (0) target = $region41
    $region40: #{tpu_custom_call.1} parent=1 // pred_region
      %74 = dma.done [#allocation9], 3072
    $region41: #{tpu_custom_call.1} parent=1 // pred_fallthru
      _
    %v76 = vld [vmem:[#allocation5] sm:$0xff]
    %v77 = vld [vmem:[#allocation2] sm:$0xf]
    %v78 = vld [vmem:[#allocation7] sm:$0xff]
    %v79 = vld [vmem:[#allocation7 + $0x8] sm:$0xf]
    %v80 = vld [vmem:[#allocation7 + $0xc] sm:$0xff]
    %v81 = vld [vmem:[#allocation7 + $0x14] sm:$0xf]
    %v82 = vld [vmem:[#allocation7 + $0x18] sm:$0xff]
    %v83 = vld [vmem:[#allocation7 + $0x20] sm:$0xf]
    %v84 = vld [vmem:[#allocation7 + $0x24] sm:$0xff]
    %v85 = vld [vmem:[#allocation7 + $0x2c] sm:$0xf]
    %v86 = vld [vmem:[#allocation7 + $0x30] sm:$0xff]
    %v87 = vld [vmem:[#allocation7 + $0x38] sm:$0xf]
    %v88 = vld [vmem:[#allocation7 + $0x3c] sm:$0xff]
    %v89 = vld [vmem:[#allocation7 + $0x44] sm:$0xf]
    %v90 = vld [vmem:[#allocation7 + $0x48] sm:$0xff]
    %v91 = vld [vmem:[#allocation7 + $0x50] sm:$0xf]
    %v92 = vld [vmem:[#allocation7 + $0x54] sm:$0xff]
    %v93 = vld [vmem:[#allocation7 + $0x5c] sm:$0xf]
    %v94 = vld [vmem:[#allocation7 + $0x60] sm:$0xff]
    %v95 = vld [vmem:[#allocation7 + $0x68] sm:$0xf]
    %v96 = vld [vmem:[#allocation7 + $0x6c] sm:$0xff]
    %v97 = vld [vmem:[#allocation7 + $0x74] sm:$0xf]
    %v98 = vld [vmem:[#allocation7 + $0x78] sm:$0xff]
    %v99 = vld [vmem:[#allocation7 + $0x80] sm:$0xf]
    %v100 = vld [vmem:[#allocation7 + $0x84] sm:$0xff]
    %v101 = vld [vmem:[#allocation7 + $0x8c] sm:$0xf]
    %v102 = vld [vmem:[#allocation7 + $0x90] sm:$0xff]
    %v103 = vld [vmem:[#allocation7 + $0x98] sm:$0xf]
    %v104 = vld [vmem:[#allocation7 + $0x9c] sm:$0xff]
    %v105 = vld [vmem:[#allocation7 + $0xa4] sm:$0xf]
    %v106 = vld [vmem:[#allocation7 + $0xa8] sm:$0xff]
    %v107 = vld [vmem:[#allocation7 + $0xb0] sm:$0xf]
    %v108 = vld [vmem:[#allocation7 + $0xb4] sm:$0xff]
    %v109 = vld [vmem:[#allocation7 + $0xbc] sm:$0xf]
    %v110 = vld [vmem:[%s4] sm:$0x7]
    %v112 = vlaneseq
    %v113 = vshrl.u32 %v112, 7
    %v114 = vsub.s32 0, %v113
    %v115 = vrot.slane %v110, %v114
    %v116 = vlaneseq
    %v117 = vshrl.u32 %v116, 7
    %v118 = vsub.s32 1, %v117
    %v119 = vrot.slane %v110, %v118
    %v120 = vlaneseq
    %v121 = vshrl.u32 %v120, 7
    %v122 = vsub.s32 2, %v121
    %v123 = vrot.slane %v110, %v122
    %v159 = vunpack.c.l.b16 %v78
    %v160 = vunpack.c.h.b16 %v78
    %v161 = vunpack.c.l.b16 %v79
    %v162 = vunpack.c.l.b16 %v80
    %v163 = vunpack.c.h.b16 %v80
    %v164 = vunpack.c.l.b16 %v81
    %v165 = vunpack.c.l.b16 %v82
    %v166 = vunpack.c.h.b16 %v82
    %v167 = vunpack.c.l.b16 %v83
    %v168 = vunpack.c.l.b16 %v84
    %v169 = vunpack.c.h.b16 %v84
    %v170 = vunpack.c.l.b16 %v85
    %v171 = vunpack.c.l.b16 %v86
    %v172 = vunpack.c.h.b16 %v86
    %v173 = vunpack.c.l.b16 %v87
    %v174 = vunpack.c.l.b16 %v88
    %v175 = vunpack.c.h.b16 %v88
    %v176 = vunpack.c.l.b16 %v89
    %v177 = vunpack.c.l.b16 %v90
    %v178 = vunpack.c.h.b16 %v90
    %v179 = vunpack.c.l.b16 %v91
    %v180 = vunpack.c.l.b16 %v92
    %v181 = vunpack.c.h.b16 %v92
    %v182 = vunpack.c.l.b16 %v93
    %v183 = vunpack.c.l.b16 %v94
    %v184 = vunpack.c.h.b16 %v94
    %v185 = vunpack.c.l.b16 %v95
    %v186 = vunpack.c.l.b16 %v96
    %v187 = vunpack.c.h.b16 %v96
    %v188 = vunpack.c.l.b16 %v97
    %v189 = vunpack.c.l.b16 %v98
    %v190 = vunpack.c.h.b16 %v98
    %v191 = vunpack.c.l.b16 %v99
    %v192 = vunpack.c.l.b16 %v100
    %v193 = vunpack.c.h.b16 %v100
    %v194 = vunpack.c.l.b16 %v101
    %v195 = vunpack.c.l.b16 %v102
    %v196 = vunpack.c.h.b16 %v102
    %v197 = vunpack.c.l.b16 %v103
    %v198 = vunpack.c.l.b16 %v104
    %v199 = vunpack.c.h.b16 %v104
    %v200 = vunpack.c.l.b16 %v105
    %v201 = vunpack.c.l.b16 %v106
    %v202 = vunpack.c.h.b16 %v106
    %v203 = vunpack.c.l.b16 %v107
    %v204 = vunpack.c.l.b16 %v108
    %v205 = vunpack.c.h.b16 %v108
    %v206 = vunpack.c.l.b16 %v109
    %v207 = vpack.c.b16 %v162, %v159
    %v208 = vpack.c.b16 %v163, %v160
    %v209 = vpack.c.b16 %v164, %v161
    %v210 = vpack.c.b16 %v168, %v165
    %v211 = vpack.c.b16 %v169, %v166
    %v212 = vpack.c.b16 %v170, %v167
    %v213 = vpack.c.b16 %v174, %v171
    %v214 = vpack.c.b16 %v175, %v172
    %v215 = vpack.c.b16 %v176, %v173
    %v216 = vpack.c.b16 %v180, %v177
    %v217 = vpack.c.b16 %v181, %v178
    %v218 = vpack.c.b16 %v182, %v179
    %v219 = vpack.c.b16 %v186, %v183
    %v220 = vpack.c.b16 %v187, %v184
    %v221 = vpack.c.b16 %v188, %v185
    %v222 = vpack.c.b16 %v192, %v189
    %v223 = vpack.c.b16 %v193, %v190
    %v224 = vpack.c.b16 %v194, %v191
    %v225 = vpack.c.b16 %v198, %v195
    %v226 = vpack.c.b16 %v199, %v196
    %v227 = vpack.c.b16 %v200, %v197
    %v228 = vpack.c.b16 %v204, %v201
    %v229 = vpack.c.b16 %v205, %v202
    %v230 = vpack.c.b16 %v206, %v203
    %255 = vmatprep.subr.bf16.mxu0 %v208
    %256 = vmatpush1.bf16.msra.mxu0 %v207
    %257 = vmatprep.subr.bf16.mxu0 %v211
    %258 = vmatpush1.bf16.msra.mxu0 %v210
    %259 = vmatprep.subr.bf16.mxu0 %v214
    %260 = vmatpush1.bf16.msra.mxu0 %v213
    %261 = vmatprep.subr.bf16.mxu0 %v217
    %262 = vmatpush1.bf16.msra.mxu0 %v216
    %263 = vmatprep.subr.bf16.mxu0 %v220
    %264 = vmatpush1.bf16.msra.mxu0 %v219
    %265 = vmatprep.subr.bf16.mxu0 %v223
    %266 = vmatpush1.bf16.msra.mxu0 %v222
    %267 = vmatprep.subr.bf16.mxu0 %v226
    %268 = vmatpush1.bf16.msra.mxu0 %v225
    %269 = vmatprep.subr.bf16.mxu0 %v229
    %270 = vmatpush1.bf16.msra.mxu0 %v228
    %271 = vmatprep.subr.bf16.mxu0 0
    %272 = vmatpush1.bf16.msra.mxu0 0
    %273 = vmatprep.subr.bf16.mxu0 0
    %274 = vmatpush1.bf16.msra.mxu0 0
    %275 = vmatprep.subr.bf16.mxu0 0
    %276 = vmatpush1.bf16.msra.mxu0 0
    %277 = vmatprep.subr.bf16.mxu0 0
    %278 = vmatpush1.bf16.msra.mxu0 0
    %279 = vmatprep.subr.bf16.mxu0 0
    %280 = vmatpush1.bf16.msra.mxu0 0
    %281 = vmatprep.subr.bf16.mxu0 0
    %282 = vmatpush1.bf16.msra.mxu0 0
    %283 = vmatprep.subr.bf16.mxu0 0
    %284 = vmatpush1.bf16.msra.mxu0 0
    %285 = vmatprep.subr.bf16.mxu0 0
    %286 = vmatpush1.bf16.msra.mxu0 0
    %287 = vmatprep.mubr.bf16.mxu0 0
    %288 = vmatmul.mubr.bf16.gmra.mrb[0].mxu0 %v77
    %v289 = vpop.f32.mrb[0].mxu0
    %v290 = vadd.f32 %v115, %v289
    %v291 = vpop.f32.mrb[0].mxu0
    %v292 = vadd.f32 %v119, %v291
    %v293 = vpop.f32.mrb[0].mxu0
    %v294 = vpop.f32.mrb[0].mxu0
    %295 = vdwg.mxu0
    %296 = vmatprep.subr.bf16.mxu0 0
    %297 = vmatpush1.bf16.msra.mxu0 %v209
    %298 = vmatprep.subr.bf16.mxu0 0
    %299 = vmatpush1.bf16.msra.mxu0 %v212
    %300 = vmatprep.subr.bf16.mxu0 0
    %301 = vmatpush1.bf16.msra.mxu0 %v215
    %302 = vmatprep.subr.bf16.mxu0 0
    %303 = vmatpush1.bf16.msra.mxu0 %v218
    %304 = vmatprep.subr.bf16.mxu0 0
    %305 = vmatpush1.bf16.msra.mxu0 %v221
    %306 = vmatprep.subr.bf16.mxu0 0
    %307 = vmatpush1.bf16.msra.mxu0 %v224
    %308 = vmatprep.subr.bf16.mxu0 0
    %309 = vmatpush1.bf16.msra.mxu0 %v227
    %310 = vmatprep.subr.bf16.mxu0 0
    %311 = vmatpush1.bf16.msra.mxu0 %v230
    %312 = vmatprep.subr.bf16.mxu0 0
    %313 = vmatpush1.bf16.msra.mxu0 0
    %314 = vmatprep.subr.bf16.mxu0 0
    %315 = vmatpush1.bf16.msra.mxu0 0
    %316 = vmatprep.subr.bf16.mxu0 0
    %317 = vmatpush1.bf16.msra.mxu0 0
    %318 = vmatprep.subr.bf16.mxu0 0
    %319 = vmatpush1.bf16.msra.mxu0 0
    %320 = vmatprep.subr.bf16.mxu0 0
    %321 = vmatpush1.bf16.msra.mxu0 0
    %322 = vmatprep.subr.bf16.mxu0 0
    %323 = vmatpush1.bf16.msra.mxu0 0
    %324 = vmatprep.subr.bf16.mxu0 0
    %325 = vmatpush1.bf16.msra.mxu0 0
    %326 = vmatprep.subr.bf16.mxu0 0
    %327 = vmatpush1.bf16.msra.mxu0 0
    %328 = vmatprep.mubr.bf16.mxu0 0
    %329 = vmatmul.mubr.bf16.gmra.mrb[0].mxu0 %v77
    %v330 = vpop.f32.mrb[0].mxu0
    %v331 = vadd.f32 %v123, %v330
    %v332 = vpop.f32.mrb[0].mxu0
    %v333 = vpop.f32.mrb[0].mxu0
    %v334 = vpop.f32.mrb[0].mxu0
    %335 = vdwg.mxu0
    %v336 = vpack.c.bf16 %v76, %v76
    %v337 = vld [vmem:[#allocation8] sm:$0xff]
    %v338 = vld [vmem:[#allocation8 + $0x8] sm:$0xf]
    %v339 = vld [vmem:[#allocation8 + $0xc] sm:$0xff]
    %v340 = vld [vmem:[#allocation8 + $0x14] sm:$0xf]
    %v341 = vld [vmem:[#allocation8 + $0x18] sm:$0xff]
    %v342 = vld [vmem:[#allocation8 + $0x20] sm:$0xf]
    %v343 = vld [vmem:[#allocation8 + $0x24] sm:$0xff]
    %v344 = vld [vmem:[#allocation8 + $0x2c] sm:$0xf]
    %v345 = vld [vmem:[#allocation8 + $0x30] sm:$0xff]
    %v346 = vld [vmem:[#allocation8 + $0x38] sm:$0xf]
    %v347 = vld [vmem:[#allocation8 + $0x3c] sm:$0xff]
    %v348 = vld [vmem:[#allocation8 + $0x44] sm:$0xf]
    %v349 = vld [vmem:[#allocation8 + $0x48] sm:$0xff]
    %v350 = vld [vmem:[#allocation8 + $0x50] sm:$0xf]
    %v351 = vld [vmem:[#allocation8 + $0x54] sm:$0xff]
    %v352 = vld [vmem:[#allocation8 + $0x5c] sm:$0xf]
    %v353 = vld [vmem:[#allocation8 + $0x60] sm:$0xff]
    %v354 = vld [vmem:[#allocation8 + $0x68] sm:$0xf]
    %v355 = vld [vmem:[#allocation8 + $0x6c] sm:$0xff]
    %v356 = vld [vmem:[#allocation8 + $0x74] sm:$0xf]
    %v357 = vld [vmem:[#allocation8 + $0x78] sm:$0xff]
    %v358 = vld [vmem:[#allocation8 + $0x80] sm:$0xf]
    %v359 = vld [vmem:[#allocation8 + $0x84] sm:$0xff]
    %v360 = vld [vmem:[#allocation8 + $0x8c] sm:$0xf]
    %v361 = vld [vmem:[#allocation8 + $0x90] sm:$0xff]
    %v362 = vld [vmem:[#allocation8 + $0x98] sm:$0xf]
    %v363 = vld [vmem:[#allocation8 + $0x9c] sm:$0xff]
    %v364 = vld [vmem:[#allocation8 + $0xa4] sm:$0xf]
    %v365 = vld [vmem:[#allocation8 + $0xa8] sm:$0xff]
    %v366 = vld [vmem:[#allocation8 + $0xb0] sm:$0xf]
    %v367 = vld [vmem:[#allocation8 + $0xb4] sm:$0xff]
    %v368 = vld [vmem:[#allocation8 + $0xbc] sm:$0xf]
    %v369 = vld [vmem:[%s5] sm:$0x7]
    %v371 = vlaneseq
    %v372 = vshrl.u32 %v371, 7
    %v373 = vsub.s32 0, %v372
    %v374 = vrot.slane %v369, %v373
    %v375 = vlaneseq
    %v376 = vshrl.u32 %v375, 7
    %v377 = vsub.s32 1, %v376
    %v378 = vrot.slane %v369, %v377
    %v379 = vlaneseq
    %v380 = vshrl.u32 %v379, 7
    %v381 = vsub.s32 2, %v380
    %v382 = vrot.slane %v369, %v381
    %v418 = vunpack.c.l.b16 %v337
    %v419 = vunpack.c.h.b16 %v337
    %v420 = vunpack.c.l.b16 %v338
    %v421 = vunpack.c.l.b16 %v339
    %v422 = vunpack.c.h.b16 %v339
    %v423 = vunpack.c.l.b16 %v340
    %v424 = vunpack.c.l.b16 %v341
    %v425 = vunpack.c.h.b16 %v341
    %v426 = vunpack.c.l.b16 %v342
    %v427 = vunpack.c.l.b16 %v343
    %v428 = vunpack.c.h.b16 %v343
    %v429 = vunpack.c.l.b16 %v344
    %v430 = vunpack.c.l.b16 %v345
    %v431 = vunpack.c.h.b16 %v345
    %v432 = vunpack.c.l.b16 %v346
    %v433 = vunpack.c.l.b16 %v347
    %v434 = vunpack.c.h.b16 %v347
    %v435 = vunpack.c.l.b16 %v348
    %v436 = vunpack.c.l.b16 %v349
    %v437 = vunpack.c.h.b16 %v349
    %v438 = vunpack.c.l.b16 %v350
    %v439 = vunpack.c.l.b16 %v351
    %v440 = vunpack.c.h.b16 %v351
    %v441 = vunpack.c.l.b16 %v352
    %v442 = vunpack.c.l.b16 %v353
    %v443 = vunpack.c.h.b16 %v353
    %v444 = vunpack.c.l.b16 %v354
    %v445 = vunpack.c.l.b16 %v355
    %v446 = vunpack.c.h.b16 %v355
    %v447 = vunpack.c.l.b16 %v356
    %v448 = vunpack.c.l.b16 %v357
    %v449 = vunpack.c.h.b16 %v357
    %v450 = vunpack.c.l.b16 %v358
    %v451 = vunpack.c.l.b16 %v359
    %v452 = vunpack.c.h.b16 %v359
    %v453 = vunpack.c.l.b16 %v360
    %v454 = vunpack.c.l.b16 %v361
    %v455 = vunpack.c.h.b16 %v361
    %v456 = vunpack.c.l.b16 %v362
    %v457 = vunpack.c.l.b16 %v363
    %v458 = vunpack.c.h.b16 %v363
    %v459 = vunpack.c.l.b16 %v364
    %v460 = vunpack.c.l.b16 %v365
    %v461 = vunpack.c.h.b16 %v365
    %v462 = vunpack.c.l.b16 %v366
    %v463 = vunpack.c.l.b16 %v367
    %v464 = vunpack.c.h.b16 %v367
    %v465 = vunpack.c.l.b16 %v368
    %v466 = vpack.c.b16 %v421, %v418
    %v467 = vpack.c.b16 %v422, %v419
    %v468 = vpack.c.b16 %v423, %v420
    %v469 = vpack.c.b16 %v427, %v424
    %v470 = vpack.c.b16 %v428, %v425
    %v471 = vpack.c.b16 %v429, %v426
    %v472 = vpack.c.b16 %v433, %v430
    %v473 = vpack.c.b16 %v434, %v431
    %v474 = vpack.c.b16 %v435, %v432
    %v475 = vpack.c.b16 %v439, %v436
    %v476 = vpack.c.b16 %v440, %v437
    %v477 = vpack.c.b16 %v441, %v438
    %v478 = vpack.c.b16 %v445, %v442
    %v479 = vpack.c.b16 %v446, %v443
    %v480 = vpack.c.b16 %v447, %v444
    %v481 = vpack.c.b16 %v451, %v448
    %v482 = vpack.c.b16 %v452, %v449
    %v483 = vpack.c.b16 %v453, %v450
    %v484 = vpack.c.b16 %v457, %v454
    %v485 = vpack.c.b16 %v458, %v455
    %v486 = vpack.c.b16 %v459, %v456
    %v487 = vpack.c.b16 %v463, %v460
    %v488 = vpack.c.b16 %v464, %v461
    %v489 = vpack.c.b16 %v465, %v462
    %514 = vmatprep.subr.bf16.mxu0 %v467
    %515 = vmatpush1.bf16.msra.mxu0 %v466
    %516 = vmatprep.subr.bf16.mxu0 %v470
    %517 = vmatpush1.bf16.msra.mxu0 %v469
    %518 = vmatprep.subr.bf16.mxu0 %v473
    %519 = vmatpush1.bf16.msra.mxu0 %v472
    %520 = vmatprep.subr.bf16.mxu0 %v476
    %521 = vmatpush1.bf16.msra.mxu0 %v475
    %522 = vmatprep.subr.bf16.mxu0 %v479
    %523 = vmatpush1.bf16.msra.mxu0 %v478
    %524 = vmatprep.subr.bf16.mxu0 %v482
    %525 = vmatpush1.bf16.msra.mxu0 %v481
    %526 = vmatprep.subr.bf16.mxu0 %v485
    %527 = vmatpush1.bf16.msra.mxu0 %v484
    %528 = vmatprep.subr.bf16.mxu0 %v488
    %529 = vmatpush1.bf16.msra.mxu0 %v487
    %530 = vmatprep.subr.bf16.mxu0 0
    %531 = vmatpush1.bf16.msra.mxu0 0
    %532 = vmatprep.subr.bf16.mxu0 0
    %533 = vmatpush1.bf16.msra.mxu0 0
    %534 = vmatprep.subr.bf16.mxu0 0
    %535 = vmatpush1.bf16.msra.mxu0 0
    %536 = vmatprep.subr.bf16.mxu0 0
    %537 = vmatpush1.bf16.msra.mxu0 0
    %538 = vmatprep.subr.bf16.mxu0 0
    %539 = vmatpush1.bf16.msra.mxu0 0
    %540 = vmatprep.subr.bf16.mxu0 0
    %541 = vmatpush1.bf16.msra.mxu0 0
    %542 = vmatprep.subr.bf16.mxu0 0
    %543 = vmatpush1.bf16.msra.mxu0 0
    %544 = vmatprep.subr.bf16.mxu0 0
    %545 = vmatpush1.bf16.msra.mxu0 0
    %546 = vmatprep.mubr.bf16.mxu0 0
    %547 = vmatmul.mubr.bf16.gmra.mrb[0].mxu0 %v336
    %v548 = vpop.f32.mrb[0].mxu0
    %v549 = vadd.f32 %v374, %v548
    %v550 = vpop.f32.mrb[0].mxu0
    %v551 = vadd.f32 %v378, %v550
    %v552 = vpop.f32.mrb[0].mxu0
    %v553 = vpop.f32.mrb[0].mxu0
    %554 = vdwg.mxu0
    %555 = vmatprep.subr.bf16.mxu0 0
    %556 = vmatpush1.bf16.msra.mxu0 %v468
    %557 = vmatprep.subr.bf16.mxu0 0
    %558 = vmatpush1.bf16.msra.mxu0 %v471
    %559 = vmatprep.subr.bf16.mxu0 0
    %560 = vmatpush1.bf16.msra.mxu0 %v474
    %561 = vmatprep.subr.bf16.mxu0 0
    %562 = vmatpush1.bf16.msra.mxu0 %v477
    %563 = vmatprep.subr.bf16.mxu0 0
    %564 = vmatpush1.bf16.msra.mxu0 %v480
    %565 = vmatprep.subr.bf16.mxu0 0
    %566 = vmatpush1.bf16.msra.mxu0 %v483
    %567 = vmatprep.subr.bf16.mxu0 0
    %568 = vmatpush1.bf16.msra.mxu0 %v486
    %569 = vmatprep.subr.bf16.mxu0 0
    %570 = vmatpush1.bf16.msra.mxu0 %v489
    %571 = vmatprep.subr.bf16.mxu0 0
    %572 = vmatpush1.bf16.msra.mxu0 0
    %573 = vmatprep.subr.bf16.mxu0 0
    %574 = vmatpush1.bf16.msra.mxu0 0
    %575 = vmatprep.subr.bf16.mxu0 0
    %576 = vmatpush1.bf16.msra.mxu0 0
    %577 = vmatprep.subr.bf16.mxu0 0
    %578 = vmatpush1.bf16.msra.mxu0 0
    %579 = vmatprep.subr.bf16.mxu0 0
    %580 = vmatpush1.bf16.msra.mxu0 0
    %581 = vmatprep.subr.bf16.mxu0 0
    %582 = vmatpush1.bf16.msra.mxu0 0
    %583 = vmatprep.subr.bf16.mxu0 0
    %584 = vmatpush1.bf16.msra.mxu0 0
    %585 = vmatprep.subr.bf16.mxu0 0
    %586 = vmatpush1.bf16.msra.mxu0 0
    %587 = vmatprep.mubr.bf16.mxu0 0
    %588 = vmatmul.mubr.bf16.gmra.mrb[0].mxu0 %v336
    %v589 = vpop.f32.mrb[0].mxu0
    %v590 = vadd.f32 %v382, %v589
    %v591 = vpop.f32.mrb[0].mxu0
    %v592 = vpop.f32.mrb[0].mxu0
    %v593 = vpop.f32.mrb[0].mxu0
    %594 = vdwg.mxu0
    %v595 = vadd.f32 %v290, %v549
    %v596 = vxor.u32 %v595, 2147483648
    %v597 = vmul.f32 %v596, 1.442695
    %v598 = vpow.pop %v597
    %v599 = vadd.f32 %v598, 1.0
    %v600 = vrcp.pop %v599
    %v601 = vmul.f32 1.0, %v600
    %v602 = vadd.f32 %v292, %v551
    %v603 = vxor.u32 %v602, 2147483648
    %v604 = vmul.f32 %v603, 1.442695
    %v605 = vpow.pop %v604
    %v606 = vadd.f32 %v605, 1.0
    %v607 = vrcp.pop %v606
    %v608 = vmul.f32 1.0, %v607
    %v609 = vmul.f32 %v601, %v590
    %v610 = vadd.f32 %v331, %v609
    %v611 = vtanh.pop %v610
    %v612 = vsub.f32 %v76, %v611
    %v613 = vmul.f32 %v608, %v612
    %v614 = vadd.f32 %v611, %v613
    %615 = vst [vmem:[#allocation10] sm:$0xff] %v614
    // Predicated region
    $region42: #{tpu_custom_call.1} parent=1 // pred_check
      _
    $region43: #{tpu_custom_call.1} parent=1 // pred_check_branch
      %617 = sbr.rel (0) target = $region45
    $region44: #{tpu_custom_call.1} parent=1 // pred_region
      %s619 = ssub.s32 128, 128
      %620 = vsyncadd [#allocation4], %s619
      %s622 = sshll.u32 [#allocation10], 4
      %s623 = int_to_ptr.vmem [resolvable:$true] %s622
      %625 = dma.vmem_to_hbm [thread:$0]  %s623, 128, %s6, [#allocation4]
    $region45: #{tpu_custom_call.1} parent=1 // pred_fallthru
      _
    // Predicated region
    $region46: #{tpu_custom_call.1} parent=1 // pred_check
      _
    $region47: #{tpu_custom_call.1} parent=1 // pred_check_branch
      %627 = sbr.rel (0) target = $region49
    $region48: #{tpu_custom_call.1} parent=1 // pred_region
      %628 = dma.done [#allocation4], 128
    $region49: #{tpu_custom_call.1} parent=1 // pred_fallthru
      _
    %629 = vsyncpa [#allocation3], 1
    %630 = vsyncpa [#allocation6], 1
    %631 = vsyncpa [#allocation9], 1
    %632 = vsyncpa [#allocation4], 1

// kernel: tpu_custom_call.1
$region0: #{tpu_custom_call.1}
  #allocation0 [shape = 'u32[]', space=smem, size = 0x4, offset = 0x4, fixed_abs, tag = 'smem constant byte address 0x4 - core index']
  #allocation1 [shape = 'u32[144,128]{1,0:T(1,128)}', space=vmem, size = 0x12000, scoped, tag = 'internal scratch']
  %s0 = inlined_call_operand.hbm [shape: bf16[8,128], index: 0, kind: input, shape index: {}]
  %s1 = inlined_call_operand.hbm [shape: f32[8,128], index: 1, kind: input, shape index: {}]
  %s2 = inlined_call_operand.hbm [shape: bf16[128,384], index: 2, kind: input, shape index: {}]
  %s3 = inlined_call_operand.hbm [shape: bf16[128,384], index: 3, kind: input, shape index: {}]
  %s4 = inlined_call_operand.vmem [shape: f32[1,384], index: 4, kind: input, shape index: {}]
  %s5 = inlined_call_operand.vmem [shape: f32[1,384], index: 5, kind: input, shape index: {}]
  %s6 = inlined_call_operand.hbm [shape: f32[8,128], index: 6, kind: output, shape index: {}]
  %s7 = sld [smem:[#allocation0]]
  $region50: #{tpu_custom_call.1} parent=0
    _
  %s9 = ssub.s32 1, %s7
  %s10 = scalar_select 0, %s9, %s7
  $region1: #{tpu_custom_call.1} parent=0
    #allocation2 [shape = 'u8[2048]{0}', space=vmem, size = 0x800, scoped, tag = 'input window, operand 0, single buffered']
    #allocation3 [shape = 's32[1]{0}', space=sflag, size = 0x4, scoped, tag = 'scoped memory for tpu_custom_call.1']
    #allocation4 [shape = 's32[1]{0}', space=sflag, size = 0x4, scoped, tag = 'scoped memory for tpu_custom_call.1']
    #allocation5 [shape = 'u8[4096]{0}', space=vmem, size = 0x1000, scoped, tag = 'input window, operand 1, single buffered']
    #allocation6 [shape = 's32[1]{0}', space=sflag, size = 0x4, scoped, tag = 'scoped memory for tpu_custom_call.1']
    #allocation7 [shape = 'u8[98304]{0}', space=vmem, size = 0x18000, scoped, tag = 'input window, operand 2, single buffered']
    #allocation8 [shape = 'u8[98304]{0}', space=vmem, size = 0x18000, scoped, tag = 'input window, operand 3, single buffered']
    #allocation9 [shape = 's32[1]{0}', space=sflag, size = 0x4, scoped, tag = 'scoped memory for tpu_custom_call.1']
    #allocation10 [shape = 'u8[4096]{0}', space=vmem, size = 0x1000, scoped, tag = 'output window, operand 0, single buffered']
    %11 = vsyncpa [#allocation3], 0
    %12 = vsyncpa [#allocation6], 0
    %13 = vsyncpa [#allocation9], 0
    %14 = vsyncpa [#allocation4], 0
    // Predicated region
    $region2: #{tpu_custom_call.1} parent=1 // pred_check
      _
    $region3: #{tpu_custom_call.1} parent=1 // pred_check_branch
      %16 = sbr.rel (0) target = $region5
    $region4: #{tpu_custom_call.1} parent=1 // pred_region
      %s18 = ssub.s32 64, 64
      %19 = vsyncadd [#allocation3], %s18
      %s21 = sshll.u32 [#allocation2], 4
      %s22 = int_to_ptr.vmem [resolvable:$true] %s21
      %24 = dma.hbm_to_vmem [thread:$0]  %s0, 64, %s22, [#allocation3]
    $region5: #{tpu_custom_call.1} parent=1 // pred_fallthru
      _
    // Predicated region
    $region6: #{tpu_custom_call.1} parent=1 // pred_check
      _
    $region7: #{tpu_custom_call.1} parent=1 // pred_check_branch
      %26 = sbr.rel (0) target = $region9
    $region8: #{tpu_custom_call.1} parent=1 // pred_region
      %s28 = ssub.s32 128, 128
      %29 = vsyncadd [#allocation6], %s28
      %s31 = sshll.u32 [#allocation5], 4
      %s32 = int_to_ptr.vmem [resolvable:$true] %s31
      %34 = dma.hbm_to_vmem [thread:$0]  %s1, 128, %s32, [#allocation6]
    $region9: #{tpu_custom_call.1} parent=1 // pred_fallthru
      _
    // Predicated region
    $region10: #{tpu_custom_call.1} parent=1 // pred_check
      _
    $region11: #{tpu_custom_call.1} parent=1 // pred_check_branch
      %36 = sbr.rel (0) target = $region13
    $region12: #{tpu_custom_call.1} parent=1 // pred_region
      %s38 = ssub.s32 3072, 3072
      %39 = vsyncadd [#allocation6], %s38
      %s40 = sshll.u32 [#allocation7], 4
      %s41 = int_to_ptr.vmem [resolvable:$true] %s40
      %46 = dma.hbm_to_vmem [thread:$0]  %s2, 3072, %s41, [#allocation6], 192, 192, 12
    $region13: #{tpu_custom_call.1} parent=1 // pred_fallthru
      _
    // Predicated region
    $region14: #{tpu_custom_call.1} parent=1 // pred_check
      _
    $region15: #{tpu_custom_call.1} parent=1 // pred_check_branch
      %48 = sbr.rel (0) target = $region17
    $region16: #{tpu_custom_call.1} parent=1 // pred_region
      %s50 = ssub.s32 3072, 3072
      %51 = vsyncadd [#allocation9], %s50
      %s52 = sshll.u32 [#allocation8], 4
      %s53 = int_to_ptr.vmem [resolvable:$true] %s52
      %58 = dma.hbm_to_vmem [thread:$0]  %s3, 3072, %s53, [#allocation9], 192, 192, 12
    $region17: #{tpu_custom_call.1} parent=1 // pred_fallthru
      _
    // Predicated region
    $region18: #{tpu_custom_call.1} parent=1 // pred_check
      _
    $region19: #{tpu_custom_call.1} parent=1 // pred_check_branch
      %60 = sbr.rel (0) target = $region21
    $region20: #{tpu_custom_call.1} parent=1 // pred_region
      _
    $region21: #{tpu_custom_call.1} parent=1 // pred_fallthru
      _
    // Predicated region
    $region22: #{tpu_custom_call.1} parent=1 // pred_check
      _
    $region23: #{tpu_custom_call.1} parent=1 // pred_check_branch
      %62 = sbr.rel (0) target = $region25
    $region24: #{tpu_custom_call.1} parent=1 // pred_region
      _
    $region25: #{tpu_custom_call.1} parent=1 // pred_fallthru
      _
    // Predicated region
    $region26: #{tpu_custom_call.1} parent=1 // pred_check
      _
    $region27: #{tpu_custom_call.1} parent=1 // pred_check_branch
      %64 = sbr.rel (0) target = $region29
    $region28: #{tpu_custom_call.1} parent=1 // pred_region
      %65 = dma.done [#allocation3], 64
    $region29: #{tpu_custom_call.1} parent=1 // pred_fallthru
      _
    // Predicated region
    $region30: #{tpu_custom_call.1} parent=1 // pred_check
      _
    $region31: #{tpu_custom_call.1} parent=1 // pred_check_branch
      %67 = sbr.rel (0) target = $region33
    $region32: #{tpu_custom_call.1} parent=1 // pred_region
      %68 = dma.done [#allocation6], 128
    $region33: #{tpu_custom_call.1} parent=1 // pred_fallthru
      _
    // Predicated region
    $region34: #{tpu_custom_call.1} parent=1 // pred_check
      _
    $region35: #{tpu_custom_call.1} parent=1 // pred_check_branch
      %70 = sbr.rel (0) target = $region37
    $region36: #{tpu_custom_call.1} parent=1 // pred_region
      %71 = dma.done [#allocation6], 3072
    $region37: #{tpu_custom_call.1} parent=1 // pred_fallthru
      _
    // Predicated region
    $region38: #{tpu_custom_call.1} parent=1 // pred_check
      _
    $region39: #{tpu_custom_call.1} parent=1 // pred_check_branch
      %73 = sbr.rel (0) target = $region41
    $region40: #{tpu_custom_call.1} parent=1 // pred_region
      %74 = dma.done [#allocation9], 3072
    $region41: #{tpu_custom_call.1} parent=1 // pred_fallthru
      _
    %v76 = vld [vmem:[#allocation5] sm:$0xff]
    %v77 = vld [vmem:[#allocation2] sm:$0xf]
    %v78 = vld [vmem:[#allocation7] sm:$0xff]
    %v79 = vld [vmem:[#allocation7 + $0x8] sm:$0xf]
    %v80 = vld [vmem:[#allocation7 + $0xc] sm:$0xff]
    %v81 = vld [vmem:[#allocation7 + $0x14] sm:$0xf]
    %v82 = vld [vmem:[#allocation7 + $0x18] sm:$0xff]
    %v83 = vld [vmem:[#allocation7 + $0x20] sm:$0xf]
    %v84 = vld [vmem:[#allocation7 + $0x24] sm:$0xff]
    %v85 = vld [vmem:[#allocation7 + $0x2c] sm:$0xf]
    %v86 = vld [vmem:[#allocation7 + $0x30] sm:$0xff]
    %v87 = vld [vmem:[#allocation7 + $0x38] sm:$0xf]
    %v88 = vld [vmem:[#allocation7 + $0x3c] sm:$0xff]
    %v89 = vld [vmem:[#allocation7 + $0x44] sm:$0xf]
    %v90 = vld [vmem:[#allocation7 + $0x48] sm:$0xff]
    %v91 = vld [vmem:[#allocation7 + $0x50] sm:$0xf]
    %v92 = vld [vmem:[#allocation7 + $0x54] sm:$0xff]
    %v93 = vld [vmem:[#allocation7 + $0x5c] sm:$0xf]
    %v94 = vld [vmem:[#allocation7 + $0x60] sm:$0xff]
    %v95 = vld [vmem:[#allocation7 + $0x68] sm:$0xf]
    %v96 = vld [vmem:[#allocation7 + $0x6c] sm:$0xff]
    %v97 = vld [vmem:[#allocation7 + $0x74] sm:$0xf]
    %v98 = vld [vmem:[#allocation7 + $0x78] sm:$0xff]
    %v99 = vld [vmem:[#allocation7 + $0x80] sm:$0xf]
    %v100 = vld [vmem:[#allocation7 + $0x84] sm:$0xff]
    %v101 = vld [vmem:[#allocation7 + $0x8c] sm:$0xf]
    %v102 = vld [vmem:[#allocation7 + $0x90] sm:$0xff]
    %v103 = vld [vmem:[#allocation7 + $0x98] sm:$0xf]
    %v104 = vld [vmem:[#allocation7 + $0x9c] sm:$0xff]
    %v105 = vld [vmem:[#allocation7 + $0xa4] sm:$0xf]
    %v106 = vld [vmem:[#allocation7 + $0xa8] sm:$0xff]
    %v107 = vld [vmem:[#allocation7 + $0xb0] sm:$0xf]
    %v108 = vld [vmem:[#allocation7 + $0xb4] sm:$0xff]
    %v109 = vld [vmem:[#allocation7 + $0xbc] sm:$0xf]
    %v110 = vld [vmem:[%s4] sm:$0x7]
    %v112 = vlaneseq
    %v113 = vshrl.u32 %v112, 7
    %v114 = vsub.s32 0, %v113
    %v115 = vrot.slane %v110, %v114
    %v116 = vlaneseq
    %v117 = vshrl.u32 %v116, 7
    %v118 = vsub.s32 1, %v117
    %v119 = vrot.slane %v110, %v118
    %v120 = vlaneseq
    %v121 = vshrl.u32 %v120, 7
    %v122 = vsub.s32 2, %v121
    %v123 = vrot.slane %v110, %v122
    %v159 = vunpack.c.l.b16 %v78
    %v160 = vunpack.c.h.b16 %v78
    %v161 = vunpack.c.l.b16 %v79
    %v162 = vunpack.c.l.b16 %v80
    %v163 = vunpack.c.h.b16 %v80
    %v164 = vunpack.c.l.b16 %v81
    %v165 = vunpack.c.l.b16 %v82
    %v166 = vunpack.c.h.b16 %v82
    %v167 = vunpack.c.l.b16 %v83
    %v168 = vunpack.c.l.b16 %v84
    %v169 = vunpack.c.h.b16 %v84
    %v170 = vunpack.c.l.b16 %v85
    %v171 = vunpack.c.l.b16 %v86
    %v172 = vunpack.c.h.b16 %v86
    %v173 = vunpack.c.l.b16 %v87
    %v174 = vunpack.c.l.b16 %v88
    %v175 = vunpack.c.h.b16 %v88
    %v176 = vunpack.c.l.b16 %v89
    %v177 = vunpack.c.l.b16 %v90
    %v178 = vunpack.c.h.b16 %v90
    %v179 = vunpack.c.l.b16 %v91
    %v180 = vunpack.c.l.b16 %v92
    %v181 = vunpack.c.h.b16 %v92
    %v182 = vunpack.c.l.b16 %v93
    %v183 = vunpack.c.l.b16 %v94
    %v184 = vunpack.c.h.b16 %v94
    %v185 = vunpack.c.l.b16 %v95
    %v186 = vunpack.c.l.b16 %v96
    %v187 = vunpack.c.h.b16 %v96
    %v188 = vunpack.c.l.b16 %v97
    %v189 = vunpack.c.l.b16 %v98
    %v190 = vunpack.c.h.b16 %v98
    %v191 = vunpack.c.l.b16 %v99
    %v192 = vunpack.c.l.b16 %v100
    %v193 = vunpack.c.h.b16 %v100
    %v194 = vunpack.c.l.b16 %v101
    %v195 = vunpack.c.l.b16 %v102
    %v196 = vunpack.c.h.b16 %v102
    %v197 = vunpack.c.l.b16 %v103
    %v198 = vunpack.c.l.b16 %v104
    %v199 = vunpack.c.h.b16 %v104
    %v200 = vunpack.c.l.b16 %v105
    %v201 = vunpack.c.l.b16 %v106
    %v202 = vunpack.c.h.b16 %v106
    %v203 = vunpack.c.l.b16 %v107
    %v204 = vunpack.c.l.b16 %v108
    %v205 = vunpack.c.h.b16 %v108
    %v206 = vunpack.c.l.b16 %v109
    %v207 = vpack.c.b16 %v162, %v159
    %v208 = vpack.c.b16 %v163, %v160
    %v209 = vpack.c.b16 %v164, %v161
    %v210 = vpack.c.b16 %v168, %v165
    %v211 = vpack.c.b16 %v169, %v166
    %v212 = vpack.c.b16 %v170, %v167
    %v213 = vpack.c.b16 %v174, %v171
    %v214 = vpack.c.b16 %v175, %v172
    %v215 = vpack.c.b16 %v176, %v173
    %v216 = vpack.c.b16 %v180, %v177
    %v217 = vpack.c.b16 %v181, %v178
    %v218 = vpack.c.b16 %v182, %v179
    %v219 = vpack.c.b16 %v186, %v183
    %v220 = vpack.c.b16 %v187, %v184
    %v221 = vpack.c.b16 %v188, %v185
    %v222 = vpack.c.b16 %v192, %v189
    %v223 = vpack.c.b16 %v193, %v190
    %v224 = vpack.c.b16 %v194, %v191
    %v225 = vpack.c.b16 %v198, %v195
    %v226 = vpack.c.b16 %v199, %v196
    %v227 = vpack.c.b16 %v200, %v197
    %v228 = vpack.c.b16 %v204, %v201
    %v229 = vpack.c.b16 %v205, %v202
    %v230 = vpack.c.b16 %v206, %v203
    %255 = vmatprep.subr.bf16.mxu0 %v208
    %256 = vmatpush1.bf16.msra.mxu0 %v207
    %257 = vmatprep.subr.bf16.mxu0 %v211
    %258 = vmatpush1.bf16.msra.mxu0 %v210
    %259 = vmatprep.subr.bf16.mxu0 %v214
    %260 = vmatpush1.bf16.msra.mxu0 %v213
    %261 = vmatprep.subr.bf16.mxu0 %v217
    %262 = vmatpush1.bf16.msra.mxu0 %v216
    %263 = vmatprep.subr.bf16.mxu0 %v220
    %264 = vmatpush1.bf16.msra.mxu0 %v219
    %265 = vmatprep.subr.bf16.mxu0 %v223
    %266 = vmatpush1.bf16.msra.mxu0 %v222
    %267 = vmatprep.subr.bf16.mxu0 %v226
    %268 = vmatpush1.bf16.msra.mxu0 %v225
    %269 = vmatprep.subr.bf16.mxu0 %v229
    %270 = vmatpush1.bf16.msra.mxu0 %v228
    %271 = vmatprep.subr.bf16.mxu0 0
    %272 = vmatpush1.bf16.msra.mxu0 0
    %273 = vmatprep.subr.bf16.mxu0 0
    %274 = vmatpush1.bf16.msra.mxu0 0
    %275 = vmatprep.subr.bf16.mxu0 0
    %276 = vmatpush1.bf16.msra.mxu0 0
    %277 = vmatprep.subr.bf16.mxu0 0
    %278 = vmatpush1.bf16.msra.mxu0 0
    %279 = vmatprep.subr.bf16.mxu0 0
    %280 = vmatpush1.bf16.msra.mxu0 0
    %281 = vmatprep.subr.bf16.mxu0 0
    %282 = vmatpush1.bf16.msra.mxu0 0
    %283 = vmatprep.subr.bf16.mxu0 0
    %284 = vmatpush1.bf16.msra.mxu0 0
    %285 = vmatprep.subr.bf16.mxu0 0
    %286 = vmatpush1.bf16.msra.mxu0 0
    %287 = vmatprep.mubr.bf16.mxu0 0
    %288 = vmatmul.mubr.bf16.gmra.mrb[0].mxu0 %v77
    %v289 = vpop.f32.mrb[0].mxu0
    %v290 = vadd.f32 %v115, %v289
    %v291 = vpop.f32.mrb[0].mxu0
    %v292 = vadd.f32 %v119, %v291
    %v293 = vpop.f32.mrb[0].mxu0
    %v294 = vpop.f32.mrb[0].mxu0
    %295 = vdwg.mxu0
    %296 = vmatprep.subr.bf16.mxu0 0
    %297 = vmatpush1.bf16.msra.mxu0 %v209
    %298 = vmatprep.subr.bf16.mxu0 0
    %299 = vmatpush1.bf16.msra.mxu0 %v212
    %300 = vmatprep.subr.bf16.mxu0 0
    %301 = vmatpush1.bf16.msra.mxu0 %v215
    %302 = vmatprep.subr.bf16.mxu0 0
    %303 = vmatpush1.bf16.msra.mxu0 %v218
    %304 = vmatprep.subr.bf16.mxu0 0
    %305 = vmatpush1.bf16.msra.mxu0 %v221
    %306 = vmatprep.subr.bf16.mxu0 0
    %307 = vmatpush1.bf16.msra.mxu0 %v224
    %308 = vmatprep.subr.bf16.mxu0 0
    %309 = vmatpush1.bf16.msra.mxu0 %v227
    %310 = vmatprep.subr.bf16.mxu0 0
    %311 = vmatpush1.bf16.msra.mxu0 %v230
    %312 = vmatprep.subr.bf16.mxu0 0
    %313 = vmatpush1.bf16.msra.mxu0 0
    %314 = vmatprep.subr.bf16.mxu0 0
    %315 = vmatpush1.bf16.msra.mxu0 0
    %316 = vmatprep.subr.bf16.mxu0 0
    %317 = vmatpush1.bf16.msra.mxu0 0
    %318 = vmatprep.subr.bf16.mxu0 0
    %319 = vmatpush1.bf16.msra.mxu0 0
    %320 = vmatprep.subr.bf16.mxu0 0
    %321 = vmatpush1.bf16.msra.mxu0 0
    %322 = vmatprep.subr.bf16.mxu0 0
    %323 = vmatpush1.bf16.msra.mxu0 0
    %324 = vmatprep.subr.bf16.mxu0 0
    %325 = vmatpush1.bf16.msra.mxu0 0
    %326 = vmatprep.subr.bf16.mxu0 0
    %327 = vmatpush1.bf16.msra.mxu0 0
    %328 = vmatprep.mubr.bf16.mxu0 0
    %329 = vmatmul.mubr.bf16.gmra.mrb[0].mxu0 %v77
    %v330 = vpop.f32.mrb[0].mxu0
    %v331 = vadd.f32 %v123, %v330
    %v332 = vpop.f32.mrb[0].mxu0
    %v333 = vpop.f32.mrb[0].mxu0
    %v334 = vpop.f32.mrb[0].mxu0
    %335 = vdwg.mxu0
    %v336 = vpack.c.bf16 %v76, %v76
    %v337 = vld [vmem:[#allocation8] sm:$0xff]
    %v338 = vld [vmem:[#allocation8 + $0x8] sm:$0xf]
    %v339 = vld [vmem:[#allocation8 + $0xc] sm:$0xff]
    %v340 = vld [vmem:[#allocation8 + $0x14] sm:$0xf]
    %v341 = vld [vmem:[#allocation8 + $0x18] sm:$0xff]
    %v342 = vld [vmem:[#allocation8 + $0x20] sm:$0xf]
    %v343 = vld [vmem:[#allocation8 + $0x24] sm:$0xff]
    %v344 = vld [vmem:[#allocation8 + $0x2c] sm:$0xf]
    %v345 = vld [vmem:[#allocation8 + $0x30] sm:$0xff]
    %v346 = vld [vmem:[#allocation8 + $0x38] sm:$0xf]
    %v347 = vld [vmem:[#allocation8 + $0x3c] sm:$0xff]
    %v348 = vld [vmem:[#allocation8 + $0x44] sm:$0xf]
    %v349 = vld [vmem:[#allocation8 + $0x48] sm:$0xff]
    %v350 = vld [vmem:[#allocation8 + $0x50] sm:$0xf]
    %v351 = vld [vmem:[#allocation8 + $0x54] sm:$0xff]
    %v352 = vld [vmem:[#allocation8 + $0x5c] sm:$0xf]
    %v353 = vld [vmem:[#allocation8 + $0x60] sm:$0xff]
    %v354 = vld [vmem:[#allocation8 + $0x68] sm:$0xf]
    %v355 = vld [vmem:[#allocation8 + $0x6c] sm:$0xff]
    %v356 = vld [vmem:[#allocation8 + $0x74] sm:$0xf]
    %v357 = vld [vmem:[#allocation8 + $0x78] sm:$0xff]
    %v358 = vld [vmem:[#allocation8 + $0x80] sm:$0xf]
    %v359 = vld [vmem:[#allocation8 + $0x84] sm:$0xff]
    %v360 = vld [vmem:[#allocation8 + $0x8c] sm:$0xf]
    %v361 = vld [vmem:[#allocation8 + $0x90] sm:$0xff]
    %v362 = vld [vmem:[#allocation8 + $0x98] sm:$0xf]
    %v363 = vld [vmem:[#allocation8 + $0x9c] sm:$0xff]
    %v364 = vld [vmem:[#allocation8 + $0xa4] sm:$0xf]
    %v365 = vld [vmem:[#allocation8 + $0xa8] sm:$0xff]
    %v366 = vld [vmem:[#allocation8 + $0xb0] sm:$0xf]
    %v367 = vld [vmem:[#allocation8 + $0xb4] sm:$0xff]
    %v368 = vld [vmem:[#allocation8 + $0xbc] sm:$0xf]
    %v369 = vld [vmem:[%s5] sm:$0x7]
    %v371 = vlaneseq
    %v372 = vshrl.u32 %v371, 7
    %v373 = vsub.s32 0, %v372
    %v374 = vrot.slane %v369, %v373
    %v375 = vlaneseq
    %v376 = vshrl.u32 %v375, 7
    %v377 = vsub.s32 1, %v376
    %v378 = vrot.slane %v369, %v377
    %v379 = vlaneseq
    %v380 = vshrl.u32 %v379, 7
    %v381 = vsub.s32 2, %v380
    %v382 = vrot.slane %v369, %v381
    %v418 = vunpack.c.l.b16 %v337
    %v419 = vunpack.c.h.b16 %v337
    %v420 = vunpack.c.l.b16 %v338
    %v421 = vunpack.c.l.b16 %v339
    %v422 = vunpack.c.h.b16 %v339
    %v423 = vunpack.c.l.b16 %v340
    %v424 = vunpack.c.l.b16 %v341
    %v425 = vunpack.c.h.b16 %v341
    %v426 = vunpack.c.l.b16 %v342
    %v427 = vunpack.c.l.b16 %v343
    %v428 = vunpack.c.h.b16 %v343
    %v429 = vunpack.c.l.b16 %v344
    %v430 = vunpack.c.l.b16 %v345
    %v431 = vunpack.c.h.b16 %v345
    %v432 = vunpack.c.l.b16 %v346
    %v433 = vunpack.c.l.b16 %v347
    %v434 = vunpack.c.h.b16 %v347
    %v435 = vunpack.c.l.b16 %v348
    %v436 = vunpack.c.l.b16 %v349
    %v437 = vunpack.c.h.b16 %v349
    %v438 = vunpack.c.l.b16 %v350
    %v439 = vunpack.c.l.b16 %v351
    %v440 = vunpack.c.h.b16 %v351
    %v441 = vunpack.c.l.b16 %v352
    %v442 = vunpack.c.l.b16 %v353
    %v443 = vunpack.c.h.b16 %v353
    %v444 = vunpack.c.l.b16 %v354
    %v445 = vunpack.c.l.b16 %v355
    %v446 = vunpack.c.h.b16 %v355
    %v447 = vunpack.c.l.b16 %v356
    %v448 = vunpack.c.l.b16 %v357
    %v449 = vunpack.c.h.b16 %v357
    %v450 = vunpack.c.l.b16 %v358
    %v451 = vunpack.c.l.b16 %v359
    %v452 = vunpack.c.h.b16 %v359
    %v453 = vunpack.c.l.b16 %v360
    %v454 = vunpack.c.l.b16 %v361
    %v455 = vunpack.c.h.b16 %v361
    %v456 = vunpack.c.l.b16 %v362
    %v457 = vunpack.c.l.b16 %v363
    %v458 = vunpack.c.h.b16 %v363
    %v459 = vunpack.c.l.b16 %v364
    %v460 = vunpack.c.l.b16 %v365
    %v461 = vunpack.c.h.b16 %v365
    %v462 = vunpack.c.l.b16 %v366
    %v463 = vunpack.c.l.b16 %v367
    %v464 = vunpack.c.h.b16 %v367
    %v465 = vunpack.c.l.b16 %v368
    %v466 = vpack.c.b16 %v421, %v418
    %v467 = vpack.c.b16 %v422, %v419
    %v468 = vpack.c.b16 %v423, %v420
    %v469 = vpack.c.b16 %v427, %v424
    %v470 = vpack.c.b16 %v428, %v425
    %v471 = vpack.c.b16 %v429, %v426
    %v472 = vpack.c.b16 %v433, %v430
    %v473 = vpack.c.b16 %v434, %v431
    %v474 = vpack.c.b16 %v435, %v432
    %v475 = vpack.c.b16 %v439, %v436
    %v476 = vpack.c.b16 %v440, %v437
    %v477 = vpack.c.b16 %v441, %v438
    %v478 = vpack.c.b16 %v445, %v442
    %v479 = vpack.c.b16 %v446, %v443
    %v480 = vpack.c.b16 %v447, %v444
    %v481 = vpack.c.b16 %v451, %v448
    %v482 = vpack.c.b16 %v452, %v449
    %v483 = vpack.c.b16 %v453, %v450
    %v484 = vpack.c.b16 %v457, %v454
    %v485 = vpack.c.b16 %v458, %v455
    %v486 = vpack.c.b16 %v459, %v456
    %v487 = vpack.c.b16 %v463, %v460
    %v488 = vpack.c.b16 %v464, %v461
    %v489 = vpack.c.b16 %v465, %v462
    %514 = vmatprep.subr.bf16.mxu0 %v467
    %515 = vmatpush1.bf16.msra.mxu0 %v466
    %516 = vmatprep.subr.bf16.mxu0 %v470
    %517 = vmatpush1.bf16.msra.mxu0 %v469
    %518 = vmatprep.subr.bf16.mxu0 %v473
    %519 = vmatpush1.bf16.msra.mxu0 %v472
    %520 = vmatprep.subr.bf16.mxu0 %v476
    %521 = vmatpush1.bf16.msra.mxu0 %v475
    %522 = vmatprep.subr.bf16.mxu0 %v479
    %523 = vmatpush1.bf16.msra.mxu0 %v478
    %524 = vmatprep.subr.bf16.mxu0 %v482
    %525 = vmatpush1.bf16.msra.mxu0 %v481
    %526 = vmatprep.subr.bf16.mxu0 %v485
    %527 = vmatpush1.bf16.msra.mxu0 %v484
    %528 = vmatprep.subr.bf16.mxu0 %v488
    %529 = vmatpush1.bf16.msra.mxu0 %v487
    %530 = vmatprep.subr.bf16.mxu0 0
    %531 = vmatpush1.bf16.msra.mxu0 0
    %532 = vmatprep.subr.bf16.mxu0 0
    %533 = vmatpush1.bf16.msra.mxu0 0
    %534 = vmatprep.subr.bf16.mxu0 0
    %535 = vmatpush1.bf16.msra.mxu0 0
    %536 = vmatprep.subr.bf16.mxu0 0
    %537 = vmatpush1.bf16.msra.mxu0 0
    %538 = vmatprep.subr.bf16.mxu0 0
    %539 = vmatpush1.bf16.msra.mxu0 0
    %540 = vmatprep.subr.bf16.mxu0 0
    %541 = vmatpush1.bf16.msra.mxu0 0
    %542 = vmatprep.subr.bf16.mxu0 0
    %543 = vmatpush1.bf16.msra.mxu0 0
    %544 = vmatprep.subr.bf16.mxu0 0
    %545 = vmatpush1.bf16.msra.mxu0 0
    %546 = vmatprep.mubr.bf16.mxu0 0
    %547 = vmatmul.mubr.bf16.gmra.mrb[0].mxu0 %v336
    %v548 = vpop.f32.mrb[0].mxu0
    %v549 = vadd.f32 %v374, %v548
    %v550 = vpop.f32.mrb[0].mxu0
    %v551 = vadd.f32 %v378, %v550
    %v552 = vpop.f32.mrb[0].mxu0
    %v553 = vpop.f32.mrb[0].mxu0
    %554 = vdwg.mxu0
    %555 = vmatprep.subr.bf16.mxu0 0
    %556 = vmatpush1.bf16.msra.mxu0 %v468
    %557 = vmatprep.subr.bf16.mxu0 0
    %558 = vmatpush1.bf16.msra.mxu0 %v471
    %559 = vmatprep.subr.bf16.mxu0 0
    %560 = vmatpush1.bf16.msra.mxu0 %v474
    %561 = vmatprep.subr.bf16.mxu0 0
    %562 = vmatpush1.bf16.msra.mxu0 %v477
    %563 = vmatprep.subr.bf16.mxu0 0
    %564 = vmatpush1.bf16.msra.mxu0 %v480
    %565 = vmatprep.subr.bf16.mxu0 0
    %566 = vmatpush1.bf16.msra.mxu0 %v483
    %567 = vmatprep.subr.bf16.mxu0 0
    %568 = vmatpush1.bf16.msra.mxu0 %v486
    %569 = vmatprep.subr.bf16.mxu0 0
    %570 = vmatpush1.bf16.msra.mxu0 %v489
    %571 = vmatprep.subr.bf16.mxu0 0
    %572 = vmatpush1.bf16.msra.mxu0 0
    %573 = vmatprep.subr.bf16.mxu0 0
    %574 = vmatpush1.bf16.msra.mxu0 0
    %575 = vmatprep.subr.bf16.mxu0 0
    %576 = vmatpush1.bf16.msra.mxu0 0
    %577 = vmatprep.subr.bf16.mxu0 0
    %578 = vmatpush1.bf16.msra.mxu0 0
    %579 = vmatprep.subr.bf16.mxu0 0
    %580 = vmatpush1.bf16.msra.mxu0 0
    %581 = vmatprep.subr.bf16.mxu0 0
    %582 = vmatpush1.bf16.msra.mxu0 0
    %583 = vmatprep.subr.bf16.mxu0 0
    %584 = vmatpush1.bf16.msra.mxu0 0
    %585 = vmatprep.subr.bf16.mxu0 0
    %586 = vmatpush1.bf16.msra.mxu0 0
    %587 = vmatprep.mubr.bf16.mxu0 0
    %588 = vmatmul.mubr.bf16.gmra.mrb[0].mxu0 %v336
    %v589 = vpop.f32.mrb[0].mxu0
    %v590 = vadd.f32 %v382, %v589
    %v591 = vpop.f32.mrb[0].mxu0
    %v592 = vpop.f32.mrb[0].mxu0
    %v593 = vpop.f32.mrb[0].mxu0
    %594 = vdwg.mxu0
    %v595 = vadd.f32 %v290, %v549
    %v596 = vxor.u32 %v595, 2147483648
    %v597 = vmul.f32 %v596, 1.442695
    %v598 = vpow.pop %v597
    %v599 = vadd.f32 %v598, 1.0
    %v600 = vrcp.pop %v599
    %v601 = vmul.f32 1.0, %v600
    %v602 = vadd.f32 %v292, %v551
    %v603 = vxor.u32 %v602, 2147483648
    %v604 = vmul.f32 %v603, 1.442695
    %v605 = vpow.pop %v604
    %v606 = vadd.f32 %v605, 1.0
    %v607 = vrcp.pop %v606
    %v608 = vmul.f32 1.0, %v607
    %v609 = vmul.f32 %v601, %v590
    %v610 = vadd.f32 %v331, %v609
    %v611 = vtanh.pop %v610
    %v612 = vsub.f32 %v76, %v611
    %v613 = vmul.f32 %v608, %v612
    %v614 = vadd.f32 %v611, %v613
    %615 = vst [vmem:[#allocation10] sm:$0xff] %v614
    // Predicated region
    $region42: #{tpu_custom_call.1} parent=1 // pred_check
      _
    $region43: #{tpu_custom_call.1} parent=1 // pred_check_branch
      %617 = sbr.rel (0) target = $region45
    $region44: #{tpu_custom_call.1} parent=1 // pred_region
      %s619 = ssub.s32 128, 128
      %620 = vsyncadd [#allocation4], %s619
      %s622 = sshll.u32 [#allocation10], 4
      %s623 = int_to_ptr.vmem [resolvable:$true] %s622
      %625 = dma.vmem_to_hbm [thread:$0]  %s623, 128, %s6, [#allocation4]
    $region45: #{tpu_custom_call.1} parent=1 // pred_fallthru
      _
    // Predicated region
    $region46: #{tpu_custom_call.1} parent=1 // pred_check
      _
    $region47: #{tpu_custom_call.1} parent=1 // pred_check_branch
      %627 = sbr.rel (0) target = $region49
    $region48: #{tpu_custom_call.1} parent=1 // pred_region
      %628 = dma.done [#allocation4], 128
    $region49: #{tpu_custom_call.1} parent=1 // pred_fallthru
      _
    %629 = vsyncpa [#allocation3], 1
    %630 = vsyncpa [#allocation6], 1
    %631 = vsyncpa [#allocation9], 1
    %632 = vsyncpa [#allocation4], 1

</llo_original>
